<compile_context>
chip_gen: v7x
topology: tpu7x:2x2x1
jax: 0.10.0
libtpu: 0.0.40
codegen_flags: <defaults>
</compile_context>

<pallas_src>
import jax
import jax.numpy as jnp
from jax import lax
from jax.experimental import pallas as pl
from jax.experimental.pallas import tpu as pltpu


# -----------------------------------------------------------------------------
# Pallas kernel
# -----------------------------------------------------------------------------
def make_flow_step_kernel(B, C, H, W, HID, actnorm_scale):
    Chalf = C // 2
    HW = H * W
    N = B * HW
    # tap offsets for a 3x3 'same' conv, tap index t = ky*3 + kx
    TAPS = [(t // 3 - 1, t % 3 - 1) for t in range(9)]
    CENTER = 4                      # (oy, ox) == (0, 0)
    pow2 = (W & (W - 1)) == 0 and (HW & (HW - 1)) == 0
    w_log2 = W.bit_length() - 1

    def actnorm_init_noscale(y):
        # _ActNorm data-dependent init + forward, scale=1.0, logdet unused:
        # out = (y - mean) / (sqrt(var) + 1e-6)   (no log/exp round trip)
        m = jnp.mean(y, axis=1, keepdims=True)
        yc = y - m
        v = jnp.mean(yc * yc, axis=1, keepdims=True)   # two-pass centered var
        return yc * (1.0 / (jnp.sqrt(v) + 1e-6))

    def kernel(x_ref, winv_ref, w1_ref, w2_ref, w3_ref, b3_ref,
               logdet_in_ref, z_ref, logdet_ref):
        x = x_ref[...]                                   # (C, N) f32

        # ---- boundary-validity masks rebuilt in-kernel (no HBM traffic) -----
        n_idx = lax.broadcasted_iota(jnp.int32, (1, N), 1)
        if pow2:                                          # shifts/ands only
            ww = n_idx & (W - 1)
            hh = (n_idx & (HW - 1)) >> w_log2
        else:                                             # generic fallback
            ww = n_idx % W
            hh = (n_idx % HW) // W

        def tap_ok(oy, ox):
            return ((hh + oy >= 0) & (hh + oy < H) &
                    (ww + ox >= 0) & (ww + ox < W))       # (1, N) bool

        # ---- ActNorm2d (outer, data-dependent init) + its logdet term -------
        m = jnp.mean(x, axis=1, keepdims=True)
        xc = x - m
        v = jnp.mean(xc * xc, axis=1, keepdims=True)
        exp_logs = actnorm_scale / (jnp.sqrt(v) + 1e-6)   # = exp(logs)
        logs = jnp.log(exp_logs)
        z = xc * exp_logs
        dlog_an = jnp.sum(logs, keepdims=True) * float(HW)        # (1, 1)

        # ---- InvertibleConv1x1: 1x1 conv == channel-mixing matmul (bf16 in,
        #      f32 accumulate).  slogdet(W)*H*W was folded into logdet_in. ----
        z = jnp.dot(winv_ref[...], z.astype(jnp.bfloat16),
                    preferred_element_type=jnp.float32)

        # ---- split_feature('split'): two contiguous row slices --------------
        z1 = z[:Chalf, :]
        z2 = z[Chalf:, :]
        z_ref[pl.ds(0, Chalf), :] = z1        # z1 passes through unchanged

        # ---- coupling block ---------------------------------------------------
        # conv1 (3x3 'same'): roll INPUTS (Cin=2 << Cout=32) -> one matmul of
        # the 9 stacked taps; cast the stack to bf16 at the dot boundary.
        taps = []
        for (oy, ox) in TAPS:
            d = oy * W + ox
            if d == 0:
                taps.append(z1)
            else:
                taps.append(jnp.where(tap_ok(oy, ox),
                                      jnp.roll(z1, -d, axis=1), 0.0))
        stacked = jnp.concatenate(taps, axis=0).astype(jnp.bfloat16)  # (9*Chalf, N)
        y = jnp.dot(w1_ref[...], stacked,
                    preferred_element_type=jnp.float32)               # (HID, N)
        y = jnp.maximum(actnorm_init_noscale(y), 0.0)

        # conv2 (1x1)
        y = jnp.dot(w2_ref[...], y.astype(jnp.bfloat16),
                    preferred_element_type=jnp.float32)
        y = jnp.maximum(actnorm_init_noscale(y), 0.0)

        # conv3 (Conv2dZeros, gain+bias+perm folded in wrapper): roll OUTPUTS
        # (Cout=4 << Cin=32).  One matmul produces all 9 tap-outputs stacked
        # along sublanes; accumulate rolled+masked 4-row blocks.
        p = jnp.dot(w3_ref[...], y.astype(jnp.bfloat16),
                    preferred_element_type=jnp.float32)   # (9*C, N) f32
        h = p[CENTER * C:(CENTER + 1) * C, :]             # center tap, no mask
        for t, (oy, ox) in enumerate(TAPS):
            if t == CENTER:
                continue
            d = oy * W + ox
            blk = jnp.roll(p[t * C:(t + 1) * C, :], -d, axis=1)
            h = h + jnp.where(tap_ok(oy, ox), blk, 0.0)
        h = h + b3_ref[...]                                # (C, N)

        # ---- affine coupling: h is already [shift ; scale_raw] ---------------
        shift = h[:Chalf, :]
        t_arg = h[Chalf:, :] + 2.0
        # numerically stable sigmoid(t) and log(sigmoid(t)), all in f32
        e = jnp.exp(-jnp.abs(t_arg))                       # in (0, 1]
        inv = 1.0 / (1.0 + e)
        scale = jnp.where(t_arg >= 0.0, inv, e * inv)
        log_scale = jnp.minimum(t_arg, 0.0) - jnp.log(1.0 + e)

        z_ref[pl.ds(Chalf, Chalf), :] = (z2 + shift) * scale

        # per-batch sum of log(scale): lanes are batch-major, so each batch is
        # a contiguous range of width H*W; write each row directly (no concat).
        lsum = jnp.sum(log_scale, axis=0, keepdims=True)   # (1, N)
        for b in range(B):
            part = jnp.sum(lsum[:, b * HW:(b + 1) * HW], axis=1, keepdims=True)
            logdet_ref[pl.ds(b, 1), :] = (logdet_in_ref[pl.ds(b, 1), :]
                                          + dlog_an + part)

    return kernel


# -----------------------------------------------------------------------------
# Wrapper (glue: layout conversion + parameter folding)
# -----------------------------------------------------------------------------
def flow_step_pallas(x_nchw, logdet, params, *, actnorm_scale=1.0, hid_channels=32):
    B, C, H, W = x_nchw.shape
    HID = hid_channels
    Chalf = C // 2
    HW = H * W
    N = B * HW

    winv = params["winv"].astype(jnp.float32)

    # invconv logdet contribution is parameter-only -> fold into incoming
    # logdet (stays traced, so the wrapper is jit-compatible).
    dlogdet_w = jnp.linalg.slogdet(winv)[1] * float(HW)
    logdet_in = logdet.reshape(B, 1).astype(jnp.float32) + dlogdet_w

    # matmul weights cast to bf16 (operands bf16, accumulation f32 in-kernel)
    winv_bf = winv.astype(jnp.bfloat16)
    # conv1 (3x3, OIHW) -> (HID, 9*Chalf): column index = tap*Chalf + in_ch
    w1 = jnp.transpose(params["w1"], (0, 2, 3, 1)).reshape(HID, 9 * Chalf)
    w1 = w1.astype(jnp.bfloat16)
    # conv2 (1x1)
    w2 = params["w2"][:, :, 0, 0].astype(jnp.bfloat16)
    # conv3 (Conv2dZeros): fold exp(3*logs3) into weight+bias, permute output
    # channels so rows = [even ('shift') channels ; odd ('scale') channels],
    # then reshape to (9*C, HID) so the kernel rolls the 4-row OUTPUT blocks.
    gain = jnp.exp(params["logs3"].reshape(C).astype(jnp.float32) * 3.0)
    w3f = params["w3"].astype(jnp.float32) * gain[:, None, None, None]
    b3f = params["b3"].astype(jnp.float32).reshape(C) * gain
    perm = jnp.concatenate([jnp.arange(0, C, 2), jnp.arange(1, C, 2)])
    w3r = jnp.transpose(w3f[perm], (2, 3, 0, 1)).reshape(9 * C, HID)   # row = t*C + c
    w3r = w3r.astype(jnp.bfloat16)
    b3 = b3f[perm].reshape(C, 1).astype(jnp.float32)

    # TODO(synk): fold this NCHW -> (C, B*H*W) transpose (and the inverse on z)
    # into the kernel's DMA once the N axis is tiled per-image.
    x2 = jnp.transpose(x_nchw, (1, 0, 2, 3)).reshape(C, N).astype(jnp.float32)

    kernel = make_flow_step_kernel(B, C, H, W, HID, actnorm_scale)

    z2d, logdet_out = pl.pallas_call(
        kernel,
        out_shape=(jax.ShapeDtypeStruct((C, N), jnp.float32),
                   jax.ShapeDtypeStruct((B, 1), jnp.float32)),
        grid=(1,),
        in_specs=[
            pl.BlockSpec((C, N), lambda i: (0, 0)),                # x  [C, B*H*W]
            pl.BlockSpec((C, C), lambda i: (0, 0)),                # invconv weight (bf16)
            pl.BlockSpec((HID, 9 * Chalf), lambda i: (0, 0)),      # conv1 folded (bf16)
            pl.BlockSpec((HID, HID), lambda i: (0, 0)),            # conv2 1x1 (bf16)
            pl.BlockSpec((9 * C, HID), lambda i: (0, 0)),          # conv3 folded (bf16)
            pl.BlockSpec((C, 1), lambda i: (0, 0)),                # conv3 bias (folded)
            pl.BlockSpec((B, 1), lambda i: (0, 0)),                # incoming logdet
        ],
        out_specs=(pl.BlockSpec((C, N), lambda i: (0, 0)),
                   pl.BlockSpec((B, 1), lambda i: (0, 0))),
        compiler_params=pltpu.CompilerParams(
            dimension_semantics=("arbitrary",),
            vmem_limit_bytes=32 * 1024 * 1024,    # safe on v5e/v6e/v7x; far above need at N=512
        ),
    )(x2, winv_bf, w1, w2, w3r, b3, logdet_in)

    z = jnp.transpose(z2d.reshape(C, B, H, W), (1, 0, 2, 3))
    return z, logdet_out.reshape(B)


# -----------------------------------------------------------------------------
# Pure-JAX reference (mirrors the PyTorch forward) for validation
# -----------------------------------------------------------------------------
def _actnorm_init_ref(y, scale):
    m = jnp.mean(y, axis=(0, 2, 3), keepdims=True)
    yc = y - m
    v = jnp.mean(yc * yc, axis=(0, 2, 3), keepdims=True)
    logs = jnp.log(scale / (jnp.sqrt(v) + 1e-6))
    return yc * jnp.exp(logs), logs


def flow_step_reference(x, logdet, params, *, actnorm_scale=1.0):
    B, C, H, W = x.shape
    Chalf = C // 2

    def conv(a, w, pad):
        return lax.conv_general_dilated(a, w, (1, 1), [(pad, pad), (pad, pad)],
                                        dimension_numbers=("NCHW", "OIHW", "NCHW"))

    z, logs = _actnorm_init_ref(x, actnorm_scale)
    logdet = logdet + jnp.sum(logs) * H * W

    winv = params["winv"]
    z = conv(z, winv.reshape(C, C, 1, 1), 0)
    logdet = logdet + jnp.linalg.slogdet(winv)[1] * H * W

    z1, z2 = z[:, :Chalf], z[:, Chalf:]

    y = conv(z1, params["w1"], 1)
    y, _ = _actnorm_init_ref(y, 1.0)
    y = jax.nn.relu(y)
    y = conv(y, params["w2"], 0)
    y, _ = _actnorm_init_ref(y, 1.0)
    y = jax.nn.relu(y)
    h = conv(y, params["w3"], 1) + params["b3"].reshape(1, C, 1, 1)
    h = h * jnp.exp(params["logs3"].reshape(1, C, 1, 1) * 3.0)

    shift, scale_raw = h[:, 0::2], h[:, 1::2]
    scale = jax.nn.sigmoid(scale_raw + 2.0)
    z2 = (z2 + shift) * scale
    logdet = logdet + jnp.sum(jnp.log(scale), axis=(1, 2, 3))
    return jnp.concatenate([z1, z2], axis=1), logdet


# -----------------------------------------------------------------------------
if __name__ == "__main__":
    B, C, H, W, HID = 2, 4, 16, 16, 32
    key = jax.random.PRNGKey(0)
    kx, kw, k1, k2, k3, kb, kl = jax.random.split(key, 7)

    x = jax.random.normal(kx, (B, C, H, W), jnp.float32)
    logdet0 = jnp.zeros((B,), jnp.float32)

    # InvertibleConv1x1: orthogonal init via QR (as in the torch __init__).
    winv = jnp.linalg.qr(jax.random.normal(kw, (C, C), jnp.float32))[0]

    # NOTE: Conv2dZeros params are zero in the reference __init__ (synthetic
    # values here so the coupling path is non-trivial).
    params = dict(
        winv=winv,
        w1=0.05 * jax.random.normal(k1, (HID, C // 2, 3, 3), jnp.float32),
        w2=0.05 * jax.random.normal(k2, (HID, HID, 1, 1), jnp.float32),
        w3=0.05 * jax.random.normal(k3, (C, HID, 3, 3), jnp.float32),
        b3=0.05 * jax.random.normal(kb, (C,), jnp.float32),
        logs3=0.05 * jax.random.normal(kl, (C,), jnp.float32),
    )

    z, logdet = flow_step_pallas(x, logdet0, params,
                                 actnorm_scale=1.0, hid_channels=HID)
    jax.block_until_ready((z, logdet))

    z_ref, logdet_ref = flow_step_reference(x, logdet0, params, actnorm_scale=1.0)

    # Tolerances account for bf16 matmul operands (f32 accumulation / stats),
    # as recommended by the perf review; the reference is pure f32.
    assert jnp.allclose(z, z_ref, atol=5e-2, rtol=1e-2), \
        float(jnp.max(jnp.abs(z - z_ref)))
    assert jnp.allclose(logdet, logdet_ref, atol=3e-1, rtol=1e-2), \
        float(jnp.max(jnp.abs(logdet - logdet_ref)))

    print("KERNEL_OK")
</pallas_src>

<mosaic_0001>
module attributes {stable_mosaic.version = 11 : i64} {
  func.func @kernel(%arg0: i32, %arg1: memref<4x512xf32, #tpu.memory_space<vmem>>, %arg2: memref<4x4xbf16, #tpu.memory_space<vmem>>, %arg3: memref<32x18xbf16, #tpu.memory_space<vmem>>, %arg4: memref<32x32xbf16, #tpu.memory_space<vmem>>, %arg5: memref<36x32xbf16, #tpu.memory_space<vmem>>, %arg6: memref<4x1xf32, #tpu.memory_space<vmem>>, %arg7: memref<2x1xf32, #tpu.memory_space<vmem>>, %arg8: memref<4x512xf32, #tpu.memory_space<vmem>>, %arg9: memref<2x1xf32, #tpu.memory_space<vmem>>) attributes {dimension_semantics = [#tpu.dimension_semantics<arbitrary>], iteration_bounds = array<i64: 1>, scalar_prefetch = 0 : i64, scratch_operands = 0 : i64, tpu.core_type = #tpu.core_type<tc>, window_params = [{pipeline_mode = #tpu.pipeline_mode<synchronous>, transform_indices = @transform_0, window_bounds = array<i64: 4, 512>}, {pipeline_mode = #tpu.pipeline_mode<synchronous>, transform_indices = @transform_1, window_bounds = array<i64: 4, 4>}, {pipeline_mode = #tpu.pipeline_mode<synchronous>, transform_indices = @transform_2, window_bounds = array<i64: 32, 18>}, {pipeline_mode = #tpu.pipeline_mode<synchronous>, transform_indices = @transform_3, window_bounds = array<i64: 32, 32>}, {pipeline_mode = #tpu.pipeline_mode<synchronous>, transform_indices = @transform_4, window_bounds = array<i64: 36, 32>}, {pipeline_mode = #tpu.pipeline_mode<synchronous>, transform_indices = @transform_5, window_bounds = array<i64: 4, 1>}, {pipeline_mode = #tpu.pipeline_mode<synchronous>, transform_indices = @transform_6, window_bounds = array<i64: 2, 1>}, {pipeline_mode = #tpu.pipeline_mode<synchronous>, transform_indices = @transform_7, window_bounds = array<i64: 4, 512>}, {pipeline_mode = #tpu.pipeline_mode<synchronous>, transform_indices = @transform_8, window_bounds = array<i64: 2, 1>}]} {
    %c0 = arith.constant 0 : index
    %c0_0 = arith.constant 0 : index
    %0 = vector.load %arg1[%c0, %c0_0] : memref<4x512xf32, #tpu.memory_space<vmem>>, vector<4x512xf32>
    %1 = tpu.iota {dimensions = array<i32: 1>} : vector<1x512xi32>
    %c15_i32 = arith.constant 15 : i32
    %2 = vector.broadcast %c15_i32 : i32 to vector<1x512xi32>
    %3 = arith.andi %1, %2 : vector<1x512xi32>
    %c255_i32 = arith.constant 255 : i32
    %4 = vector.broadcast %c255_i32 : i32 to vector<1x512xi32>
    %5 = arith.andi %1, %4 : vector<1x512xi32>
    %c4_i32 = arith.constant 4 : i32
    %6 = vector.broadcast %c4_i32 : i32 to vector<1x512xi32>
    %7 = arith.shrsi %5, %6 : vector<1x512xi32>
    %cst = arith.constant dense<0.000000e+00> : vector<4xf32>
    %8 = vector.multi_reduction <add>, %0, %cst [1] : vector<4x512xf32> to vector<4xf32>
    %9 = vector.shape_cast %8 : vector<4xf32> to vector<4x1xf32>
    %cst_1 = arith.constant 5.120000e+02 : f32
    %10 = vector.broadcast %cst_1 : f32 to vector<4x1xf32>
    %11 = arith.divf %9, %10 : vector<4x1xf32>
    %12 = vector.broadcast %11 : vector<4x1xf32> to vector<4x512xf32>
    %13 = arith.subf %0, %12 : vector<4x512xf32>
    %14 = arith.mulf %13, %13 : vector<4x512xf32>
    %cst_2 = arith.constant dense<0.000000e+00> : vector<4xf32>
    %15 = vector.multi_reduction <add>, %14, %cst_2 [1] : vector<4x512xf32> to vector<4xf32>
    %16 = vector.shape_cast %15 : vector<4xf32> to vector<4x1xf32>
    %cst_3 = arith.constant 5.120000e+02 : f32
    %17 = vector.broadcast %cst_3 : f32 to vector<4x1xf32>
    %18 = arith.divf %16, %17 : vector<4x1xf32>
    %19 = math.sqrt %18 : vector<4x1xf32>
    %cst_4 = arith.constant 9.99999997E-7 : f32
    %20 = vector.broadcast %cst_4 : f32 to vector<4x1xf32>
    %21 = arith.addf %19, %20 : vector<4x1xf32>
    %cst_5 = arith.constant 1.000000e+00 : f32
    %22 = vector.broadcast %cst_5 : f32 to vector<4x1xf32>
    %23 = arith.divf %22, %21 : vector<4x1xf32>
    %24 = math.log %23 : vector<4x1xf32>
    %25 = vector.broadcast %23 : vector<4x1xf32> to vector<4x512xf32>
    %26 = arith.mulf %13, %25 : vector<4x512xf32>
    %27 = vector.shape_cast %24 : vector<4x1xf32> to vector<1x4x1xf32>
    %cst_6 = arith.constant dense<0.000000e+00> : vector<1xf32>
    %28 = vector.multi_reduction <add>, %27, %cst_6 [1, 2] : vector<1x4x1xf32> to vector<1xf32>
    %29 = vector.shape_cast %28 : vector<1xf32> to vector<1x1x1xf32>
    %30 = vector.extract %29[0, 0, 0] : f32 from vector<1x1x1xf32>
    %31 = vector.broadcast %30 : f32 to vector<1x1xf32>
    %cst_7 = arith.constant 2.560000e+02 : f32
    %32 = vector.broadcast %cst_7 : f32 to vector<1x1xf32>
    %33 = arith.mulf %31, %32 : vector<1x1xf32>
    %c0_8 = arith.constant 0 : index
    %c0_9 = arith.constant 0 : index
    %34 = vector.load %arg2[%c0_8, %c0_9] : memref<4x4xbf16, #tpu.memory_space<vmem>>, vector<4x4xbf16>
    %35 = arith.truncf %26 : vector<4x512xf32> to vector<4x512xbf16>
    %cst_10 = arith.constant dense<0.000000e+00> : vector<4x512xf32>
    %36 = tpu.matmul %34, %35, %cst_10 {dimension_numbers = #tpu.dot_dimension_numbers<[1], [0], [0], [1], [0, 0, 1, 1], [], []>} : vector<4x4xbf16>, vector<4x512xbf16>, vector<4x512xf32> -> vector<4x512xf32>
    %37 = vector.extract_strided_slice %36 {offsets = [0, 0], sizes = [2, 512], strides = [1, 1]} : vector<4x512xf32> to vector<2x512xf32>
    %38 = vector.extract_strided_slice %36 {offsets = [2, 0], sizes = [2, 512], strides = [1, 1]} : vector<4x512xf32> to vector<2x512xf32>
    %c0_11 = arith.constant 0 : index
    %c0_12 = arith.constant 0 : index
    %39 = vector.load %arg8[%c0_11, %c0_12] : memref<4x512xf32, #tpu.memory_space<vmem>>, vector<2x512xf32>
    tpu.vector_store %arg8[%c0_11, %c0_12], %37 {strides = array<i32>} : memref<4x512xf32, #tpu.memory_space<vmem>>, vector<2x512xf32>,
    %c-1_i32 = arith.constant -1 : i32
    %40 = vector.broadcast %c-1_i32 : i32 to vector<1x512xi32>
    %41 = arith.addi %7, %40 : vector<1x512xi32>
    %c0_i32 = arith.constant 0 : i32
    %42 = vector.broadcast %c0_i32 : i32 to vector<1x512xi32>
    %43 = arith.cmpi sge, %41, %42 : vector<1x512xi32>
    %c-1_i32_13 = arith.constant -1 : i32
    %44 = vector.broadcast %c-1_i32_13 : i32 to vector<1x512xi32>
    %45 = arith.addi %7, %44 : vector<1x512xi32>
    %c16_i32 = arith.constant 16 : i32
    %46 = vector.broadcast %c16_i32 : i32 to vector<1x512xi32>
    %47 = arith.cmpi slt, %45, %46 : vector<1x512xi32>
    %48 = arith.andi %43, %47 : vector<1x512xi1>
    %c-1_i32_14 = arith.constant -1 : i32
    %49 = vector.broadcast %c-1_i32_14 : i32 to vector<1x512xi32>
    %50 = arith.addi %3, %49 : vector<1x512xi32>
    %c0_i32_15 = arith.constant 0 : i32
    %51 = vector.broadcast %c0_i32_15 : i32 to vector<1x512xi32>
    %52 = arith.cmpi sge, %50, %51 : vector<1x512xi32>
    %53 = arith.andi %48, %52 : vector<1x512xi1>
    %c-1_i32_16 = arith.constant -1 : i32
    %54 = vector.broadcast %c-1_i32_16 : i32 to vector<1x512xi32>
    %55 = arith.addi %3, %54 : vector<1x512xi32>
    %c16_i32_17 = arith.constant 16 : i32
    %56 = vector.broadcast %c16_i32_17 : i32 to vector<1x512xi32>
    %57 = arith.cmpi slt, %55, %56 : vector<1x512xi32>
    %58 = arith.andi %53, %57 : vector<1x512xi1>
    %59 = vector.extract_strided_slice %37 {offsets = [0, 495], sizes = [2, 17], strides = [1, 1]} : vector<2x512xf32> to vector<2x17xf32>
    %60 = vector.extract_strided_slice %37 {offsets = [0, 0], sizes = [2, 495], strides = [1, 1]} : vector<2x512xf32> to vector<2x495xf32>
    %61 = tpu.concatenate %59, %60 in 1 : vector<2x17xf32>, vector<2x495xf32> -> vector<2x512xf32>
    %cst_18 = arith.constant 0.000000e+00 : f32
    %62 = vector.shape_cast %58 : vector<1x512xi1> to vector<1x512xi1>
    %63 = vector.broadcast %62 : vector<1x512xi1> to vector<2x512xi1>
    %64 = vector.broadcast %cst_18 : f32 to vector<2x512xf32>
    %65 = arith.select %63, %61, %64 : vector<2x512xi1>, vector<2x512xf32>
    %c-1_i32_19 = arith.constant -1 : i32
    %66 = vector.broadcast %c-1_i32_19 : i32 to vector<1x512xi32>
    %67 = arith.addi %7, %66 : vector<1x512xi32>
    %c0_i32_20 = arith.constant 0 : i32
    %68 = vector.broadcast %c0_i32_20 : i32 to vector<1x512xi32>
    %69 = arith.cmpi sge, %67, %68 : vector<1x512xi32>
    %c-1_i32_21 = arith.constant -1 : i32
    %70 = vector.broadcast %c-1_i32_21 : i32 to vector<1x512xi32>
    %71 = arith.addi %7, %70 : vector<1x512xi32>
    %c16_i32_22 = arith.constant 16 : i32
    %72 = vector.broadcast %c16_i32_22 : i32 to vector<1x512xi32>
    %73 = arith.cmpi slt, %71, %72 : vector<1x512xi32>
    %74 = arith.andi %69, %73 : vector<1x512xi1>
    %c0_i32_23 = arith.constant 0 : i32
    %75 = vector.broadcast %c0_i32_23 : i32 to vector<1x512xi32>
    %76 = arith.addi %3, %75 : vector<1x512xi32>
    %c0_i32_24 = arith.constant 0 : i32
    %77 = vector.broadcast %c0_i32_24 : i32 to vector<1x512xi32>
    %78 = arith.cmpi sge, %76, %77 : vector<1x512xi32>
    %79 = arith.andi %74, %78 : vector<1x512xi1>
    %c0_i32_25 = arith.constant 0 : i32
    %80 = vector.broadcast %c0_i32_25 : i32 to vector<1x512xi32>
    %81 = arith.addi %3, %80 : vector<1x512xi32>
    %c16_i32_26 = arith.constant 16 : i32
    %82 = vector.broadcast %c16_i32_26 : i32 to vector<1x512xi32>
    %83 = arith.cmpi slt, %81, %82 : vector<1x512xi32>
    %84 = arith.andi %79, %83 : vector<1x512xi1>
    %85 = vector.extract_strided_slice %37 {offsets = [0, 496], sizes = [2, 16], strides = [1, 1]} : vector<2x512xf32> to vector<2x16xf32>
    %86 = vector.extract_strided_slice %37 {offsets = [0, 0], sizes = [2, 496], strides = [1, 1]} : vector<2x512xf32> to vector<2x496xf32>
    %87 = tpu.concatenate %85, %86 in 1 : vector<2x16xf32>, vector<2x496xf32> -> vector<2x512xf32>
    %cst_27 = arith.constant 0.000000e+00 : f32
    %88 = vector.shape_cast %84 : vector<1x512xi1> to vector<1x512xi1>
    %89 = vector.broadcast %88 : vector<1x512xi1> to vector<2x512xi1>
    %90 = vector.broadcast %cst_27 : f32 to vector<2x512xf32>
    %91 = arith.select %89, %87, %90 : vector<2x512xi1>, vector<2x512xf32>
    %c-1_i32_28 = arith.constant -1 : i32
    %92 = vector.broadcast %c-1_i32_28 : i32 to vector<1x512xi32>
    %93 = arith.addi %7, %92 : vector<1x512xi32>
    %c0_i32_29 = arith.constant 0 : i32
    %94 = vector.broadcast %c0_i32_29 : i32 to vector<1x512xi32>
    %95 = arith.cmpi sge, %93, %94 : vector<1x512xi32>
    %c-1_i32_30 = arith.constant -1 : i32
    %96 = vector.broadcast %c-1_i32_30 : i32 to vector<1x512xi32>
    %97 = arith.addi %7, %96 : vector<1x512xi32>
    %c16_i32_31 = arith.constant 16 : i32
    %98 = vector.broadcast %c16_i32_31 : i32 to vector<1x512xi32>
    %99 = arith.cmpi slt, %97, %98 : vector<1x512xi32>
    %100 = arith.andi %95, %99 : vector<1x512xi1>
    %c1_i32 = arith.constant 1 : i32
    %101 = vector.broadcast %c1_i32 : i32 to vector<1x512xi32>
    %102 = arith.addi %3, %101 : vector<1x512xi32>
    %c0_i32_32 = arith.constant 0 : i32
    %103 = vector.broadcast %c0_i32_32 : i32 to vector<1x512xi32>
    %104 = arith.cmpi sge, %102, %103 : vector<1x512xi32>
    %105 = arith.andi %100, %104 : vector<1x512xi1>
    %c1_i32_33 = arith.constant 1 : i32
    %106 = vector.broadcast %c1_i32_33 : i32 to vector<1x512xi32>
    %107 = arith.addi %3, %106 : vector<1x512xi32>
    %c16_i32_34 = arith.constant 16 : i32
    %108 = vector.broadcast %c16_i32_34 : i32 to vector<1x512xi32>
    %109 = arith.cmpi slt, %107, %108 : vector<1x512xi32>
    %110 = arith.andi %105, %109 : vector<1x512xi1>
    %111 = vector.extract_strided_slice %37 {offsets = [0, 497], sizes = [2, 15], strides = [1, 1]} : vector<2x512xf32> to vector<2x15xf32>
    %112 = vector.extract_strided_slice %37 {offsets = [0, 0], sizes = [2, 497], strides = [1, 1]} : vector<2x512xf32> to vector<2x497xf32>
    %113 = tpu.concatenate %111, %112 in 1 : vector<2x15xf32>, vector<2x497xf32> -> vector<2x512xf32>
    %cst_35 = arith.constant 0.000000e+00 : f32
    %114 = vector.shape_cast %110 : vector<1x512xi1> to vector<1x512xi1>
    %115 = vector.broadcast %114 : vector<1x512xi1> to vector<2x512xi1>
    %116 = vector.broadcast %cst_35 : f32 to vector<2x512xf32>
    %117 = arith.select %115, %113, %116 : vector<2x512xi1>, vector<2x512xf32>
    %c0_i32_36 = arith.constant 0 : i32
    %118 = vector.broadcast %c0_i32_36 : i32 to vector<1x512xi32>
    %119 = arith.addi %7, %118 : vector<1x512xi32>
    %c0_i32_37 = arith.constant 0 : i32
    %120 = vector.broadcast %c0_i32_37 : i32 to vector<1x512xi32>
    %121 = arith.cmpi sge, %119, %120 : vector<1x512xi32>
    %c0_i32_38 = arith.constant 0 : i32
    %122 = vector.broadcast %c0_i32_38 : i32 to vector<1x512xi32>
    %123 = arith.addi %7, %122 : vector<1x512xi32>
    %c16_i32_39 = arith.constant 16 : i32
    %124 = vector.broadcast %c16_i32_39 : i32 to vector<1x512xi32>
    %125 = arith.cmpi slt, %123, %124 : vector<1x512xi32>
    %126 = arith.andi %121, %125 : vector<1x512xi1>
    %c-1_i32_40 = arith.constant -1 : i32
    %127 = vector.broadcast %c-1_i32_40 : i32 to vector<1x512xi32>
    %128 = arith.addi %3, %127 : vector<1x512xi32>
    %c0_i32_41 = arith.constant 0 : i32
    %129 = vector.broadcast %c0_i32_41 : i32 to vector<1x512xi32>
    %130 = arith.cmpi sge, %128, %129 : vector<1x512xi32>
    %131 = arith.andi %126, %130 : vector<1x512xi1>
    %c-1_i32_42 = arith.constant -1 : i32
    %132 = vector.broadcast %c-1_i32_42 : i32 to vector<1x512xi32>
    %133 = arith.addi %3, %132 : vector<1x512xi32>
    %c16_i32_43 = arith.constant 16 : i32
    %134 = vector.broadcast %c16_i32_43 : i32 to vector<1x512xi32>
    %135 = arith.cmpi slt, %133, %134 : vector<1x512xi32>
    %136 = arith.andi %131, %135 : vector<1x512xi1>
    %137 = vector.extract_strided_slice %37 {offsets = [0, 511], sizes = [2, 1], strides = [1, 1]} : vector<2x512xf32> to vector<2x1xf32>
    %138 = vector.extract_strided_slice %37 {offsets = [0, 0], sizes = [2, 511], strides = [1, 1]} : vector<2x512xf32> to vector<2x511xf32>
    %139 = tpu.concatenate %137, %138 in 1 : vector<2x1xf32>, vector<2x511xf32> -> vector<2x512xf32>
    %cst_44 = arith.constant 0.000000e+00 : f32
    %140 = vector.shape_cast %136 : vector<1x512xi1> to vector<1x512xi1>
    %141 = vector.broadcast %140 : vector<1x512xi1> to vector<2x512xi1>
    %142 = vector.broadcast %cst_44 : f32 to vector<2x512xf32>
    %143 = arith.select %141, %139, %142 : vector<2x512xi1>, vector<2x512xf32>
    %c0_i32_45 = arith.constant 0 : i32
    %144 = vector.broadcast %c0_i32_45 : i32 to vector<1x512xi32>
    %145 = arith.addi %7, %144 : vector<1x512xi32>
    %c0_i32_46 = arith.constant 0 : i32
    %146 = vector.broadcast %c0_i32_46 : i32 to vector<1x512xi32>
    %147 = arith.cmpi sge, %145, %146 : vector<1x512xi32>
    %c0_i32_47 = arith.constant 0 : i32
    %148 = vector.broadcast %c0_i32_47 : i32 to vector<1x512xi32>
    %149 = arith.addi %7, %148 : vector<1x512xi32>
    %c16_i32_48 = arith.constant 16 : i32
    %150 = vector.broadcast %c16_i32_48 : i32 to vector<1x512xi32>
    %151 = arith.cmpi slt, %149, %150 : vector<1x512xi32>
    %152 = arith.andi %147, %151 : vector<1x512xi1>
    %c1_i32_49 = arith.constant 1 : i32
    %153 = vector.broadcast %c1_i32_49 : i32 to vector<1x512xi32>
    %154 = arith.addi %3, %153 : vector<1x512xi32>
    %c0_i32_50 = arith.constant 0 : i32
    %155 = vector.broadcast %c0_i32_50 : i32 to vector<1x512xi32>
    %156 = arith.cmpi sge, %154, %155 : vector<1x512xi32>
    %157 = arith.andi %152, %156 : vector<1x512xi1>
    %c1_i32_51 = arith.constant 1 : i32
    %158 = vector.broadcast %c1_i32_51 : i32 to vector<1x512xi32>
    %159 = arith.addi %3, %158 : vector<1x512xi32>
    %c16_i32_52 = arith.constant 16 : i32
    %160 = vector.broadcast %c16_i32_52 : i32 to vector<1x512xi32>
    %161 = arith.cmpi slt, %159, %160 : vector<1x512xi32>
    %162 = arith.andi %157, %161 : vector<1x512xi1>
    %163 = vector.extract_strided_slice %37 {offsets = [0, 1], sizes = [2, 511], strides = [1, 1]} : vector<2x512xf32> to vector<2x511xf32>
    %164 = vector.extract_strided_slice %37 {offsets = [0, 0], sizes = [2, 1], strides = [1, 1]} : vector<2x512xf32> to vector<2x1xf32>
    %165 = tpu.concatenate %163, %164 in 1 : vector<2x511xf32>, vector<2x1xf32> -> vector<2x512xf32>
    %cst_53 = arith.constant 0.000000e+00 : f32
    %166 = vector.shape_cast %162 : vector<1x512xi1> to vector<1x512xi1>
    %167 = vector.broadcast %166 : vector<1x512xi1> to vector<2x512xi1>
    %168 = vector.broadcast %cst_53 : f32 to vector<2x512xf32>
    %169 = arith.select %167, %165, %168 : vector<2x512xi1>, vector<2x512xf32>
    %c1_i32_54 = arith.constant 1 : i32
    %170 = vector.broadcast %c1_i32_54 : i32 to vector<1x512xi32>
    %171 = arith.addi %7, %170 : vector<1x512xi32>
    %c0_i32_55 = arith.constant 0 : i32
    %172 = vector.broadcast %c0_i32_55 : i32 to vector<1x512xi32>
    %173 = arith.cmpi sge, %171, %172 : vector<1x512xi32>
    %c1_i32_56 = arith.constant 1 : i32
    %174 = vector.broadcast %c1_i32_56 : i32 to vector<1x512xi32>
    %175 = arith.addi %7, %174 : vector<1x512xi32>
    %c16_i32_57 = arith.constant 16 : i32
    %176 = vector.broadcast %c16_i32_57 : i32 to vector<1x512xi32>
    %177 = arith.cmpi slt, %175, %176 : vector<1x512xi32>
    %178 = arith.andi %173, %177 : vector<1x512xi1>
    %c-1_i32_58 = arith.constant -1 : i32
    %179 = vector.broadcast %c-1_i32_58 : i32 to vector<1x512xi32>
    %180 = arith.addi %3, %179 : vector<1x512xi32>
    %c0_i32_59 = arith.constant 0 : i32
    %181 = vector.broadcast %c0_i32_59 : i32 to vector<1x512xi32>
    %182 = arith.cmpi sge, %180, %181 : vector<1x512xi32>
    %183 = arith.andi %178, %182 : vector<1x512xi1>
    %c-1_i32_60 = arith.constant -1 : i32
    %184 = vector.broadcast %c-1_i32_60 : i32 to vector<1x512xi32>
    %185 = arith.addi %3, %184 : vector<1x512xi32>
    %c16_i32_61 = arith.constant 16 : i32
    %186 = vector.broadcast %c16_i32_61 : i32 to vector<1x512xi32>
    %187 = arith.cmpi slt, %185, %186 : vector<1x512xi32>
    %188 = arith.andi %183, %187 : vector<1x512xi1>
    %189 = vector.extract_strided_slice %37 {offsets = [0, 15], sizes = [2, 497], strides = [1, 1]} : vector<2x512xf32> to vector<2x497xf32>
    %190 = vector.extract_strided_slice %37 {offsets = [0, 0], sizes = [2, 15], strides = [1, 1]} : vector<2x512xf32> to vector<2x15xf32>
    %191 = tpu.concatenate %189, %190 in 1 : vector<2x497xf32>, vector<2x15xf32> -> vector<2x512xf32>
    %cst_62 = arith.constant 0.000000e+00 : f32
    %192 = vector.shape_cast %188 : vector<1x512xi1> to vector<1x512xi1>
    %193 = vector.broadcast %192 : vector<1x512xi1> to vector<2x512xi1>
    %194 = vector.broadcast %cst_62 : f32 to vector<2x512xf32>
    %195 = arith.select %193, %191, %194 : vector<2x512xi1>, vector<2x512xf32>
    %c1_i32_63 = arith.constant 1 : i32
    %196 = vector.broadcast %c1_i32_63 : i32 to vector<1x512xi32>
    %197 = arith.addi %7, %196 : vector<1x512xi32>
    %c0_i32_64 = arith.constant 0 : i32
    %198 = vector.broadcast %c0_i32_64 : i32 to vector<1x512xi32>
    %199 = arith.cmpi sge, %197, %198 : vector<1x512xi32>
    %c1_i32_65 = arith.constant 1 : i32
    %200 = vector.broadcast %c1_i32_65 : i32 to vector<1x512xi32>
    %201 = arith.addi %7, %200 : vector<1x512xi32>
    %c16_i32_66 = arith.constant 16 : i32
    %202 = vector.broadcast %c16_i32_66 : i32 to vector<1x512xi32>
    %203 = arith.cmpi slt, %201, %202 : vector<1x512xi32>
    %204 = arith.andi %199, %203 : vector<1x512xi1>
    %c0_i32_67 = arith.constant 0 : i32
    %205 = vector.broadcast %c0_i32_67 : i32 to vector<1x512xi32>
    %206 = arith.addi %3, %205 : vector<1x512xi32>
    %c0_i32_68 = arith.constant 0 : i32
    %207 = vector.broadcast %c0_i32_68 : i32 to vector<1x512xi32>
    %208 = arith.cmpi sge, %206, %207 : vector<1x512xi32>
    %209 = arith.andi %204, %208 : vector<1x512xi1>
    %c0_i32_69 = arith.constant 0 : i32
    %210 = vector.broadcast %c0_i32_69 : i32 to vector<1x512xi32>
    %211 = arith.addi %3, %210 : vector<1x512xi32>
    %c16_i32_70 = arith.constant 16 : i32
    %212 = vector.broadcast %c16_i32_70 : i32 to vector<1x512xi32>
    %213 = arith.cmpi slt, %211, %212 : vector<1x512xi32>
    %214 = arith.andi %209, %213 : vector<1x512xi1>
    %215 = vector.extract_strided_slice %37 {offsets = [0, 16], sizes = [2, 496], strides = [1, 1]} : vector<2x512xf32> to vector<2x496xf32>
    %216 = vector.extract_strided_slice %37 {offsets = [0, 0], sizes = [2, 16], strides = [1, 1]} : vector<2x512xf32> to vector<2x16xf32>
    %217 = tpu.concatenate %215, %216 in 1 : vector<2x496xf32>, vector<2x16xf32> -> vector<2x512xf32>
    %cst_71 = arith.constant 0.000000e+00 : f32
    %218 = vector.shape_cast %214 : vector<1x512xi1> to vector<1x512xi1>
    %219 = vector.broadcast %218 : vector<1x512xi1> to vector<2x512xi1>
    %220 = vector.broadcast %cst_71 : f32 to vector<2x512xf32>
    %221 = arith.select %219, %217, %220 : vector<2x512xi1>, vector<2x512xf32>
    %c1_i32_72 = arith.constant 1 : i32
    %222 = vector.broadcast %c1_i32_72 : i32 to vector<1x512xi32>
    %223 = arith.addi %7, %222 : vector<1x512xi32>
    %c0_i32_73 = arith.constant 0 : i32
    %224 = vector.broadcast %c0_i32_73 : i32 to vector<1x512xi32>
    %225 = arith.cmpi sge, %223, %224 : vector<1x512xi32>
    %c1_i32_74 = arith.constant 1 : i32
    %226 = vector.broadcast %c1_i32_74 : i32 to vector<1x512xi32>
    %227 = arith.addi %7, %226 : vector<1x512xi32>
    %c16_i32_75 = arith.constant 16 : i32
    %228 = vector.broadcast %c16_i32_75 : i32 to vector<1x512xi32>
    %229 = arith.cmpi slt, %227, %228 : vector<1x512xi32>
    %230 = arith.andi %225, %229 : vector<1x512xi1>
    %c1_i32_76 = arith.constant 1 : i32
    %231 = vector.broadcast %c1_i32_76 : i32 to vector<1x512xi32>
    %232 = arith.addi %3, %231 : vector<1x512xi32>
    %c0_i32_77 = arith.constant 0 : i32
    %233 = vector.broadcast %c0_i32_77 : i32 to vector<1x512xi32>
    %234 = arith.cmpi sge, %232, %233 : vector<1x512xi32>
    %235 = arith.andi %230, %234 : vector<1x512xi1>
    %c1_i32_78 = arith.constant 1 : i32
    %236 = vector.broadcast %c1_i32_78 : i32 to vector<1x512xi32>
    %237 = arith.addi %3, %236 : vector<1x512xi32>
    %c16_i32_79 = arith.constant 16 : i32
    %238 = vector.broadcast %c16_i32_79 : i32 to vector<1x512xi32>
    %239 = arith.cmpi slt, %237, %238 : vector<1x512xi32>
    %240 = arith.andi %235, %239 : vector<1x512xi1>
    %241 = vector.extract_strided_slice %37 {offsets = [0, 17], sizes = [2, 495], strides = [1, 1]} : vector<2x512xf32> to vector<2x495xf32>
    %242 = vector.extract_strided_slice %37 {offsets = [0, 0], sizes = [2, 17], strides = [1, 1]} : vector<2x512xf32> to vector<2x17xf32>
    %243 = tpu.concatenate %241, %242 in 1 : vector<2x495xf32>, vector<2x17xf32> -> vector<2x512xf32>
    %cst_80 = arith.constant 0.000000e+00 : f32
    %244 = vector.shape_cast %240 : vector<1x512xi1> to vector<1x512xi1>
    %245 = vector.broadcast %244 : vector<1x512xi1> to vector<2x512xi1>
    %246 = vector.broadcast %cst_80 : f32 to vector<2x512xf32>
    %247 = arith.select %245, %243, %246 : vector<2x512xi1>, vector<2x512xf32>
    %248 = tpu.concatenate %65, %91, %117, %143, %37, %169, %195, %221, %247 in 0 : vector<2x512xf32>, vector<2x512xf32>, vector<2x512xf32>, vector<2x512xf32>, vector<2x512xf32>, vector<2x512xf32>, vector<2x512xf32>, vector<2x512xf32>, vector<2x512xf32> -> vector<18x512xf32>
    %249 = arith.truncf %248 : vector<18x512xf32> to vector<18x512xbf16>
    %c0_81 = arith.constant 0 : index
    %c0_82 = arith.constant 0 : index
    %250 = vector.load %arg3[%c0_81, %c0_82] : memref<32x18xbf16, #tpu.memory_space<vmem>>, vector<32x18xbf16>
    %cst_83 = arith.constant dense<0.000000e+00> : vector<32x512xf32>
    %251 = tpu.matmul %250, %249, %cst_83 {dimension_numbers = #tpu.dot_dimension_numbers<[1], [0], [0], [1], [0, 0, 1, 1], [], []>} : vector<32x18xbf16>, vector<18x512xbf16>, vector<32x512xf32> -> vector<32x512xf32>
    %cst_84 = arith.constant dense<0.000000e+00> : vector<32xf32>
    %252 = vector.multi_reduction <add>, %251, %cst_84 [1] : vector<32x512xf32> to vector<32xf32>
    %253 = vector.shape_cast %252 : vector<32xf32> to vector<32x1xf32>
    %cst_85 = arith.constant 5.120000e+02 : f32
    %254 = vector.broadcast %cst_85 : f32 to vector<32x1xf32>
    %255 = arith.divf %253, %254 : vector<32x1xf32>
    %256 = vector.broadcast %255 : vector<32x1xf32> to vector<32x512xf32>
    %257 = arith.subf %251, %256 : vector<32x512xf32>
    %258 = arith.mulf %257, %257 : vector<32x512xf32>
    %cst_86 = arith.constant dense<0.000000e+00> : vector<32xf32>
    %259 = vector.multi_reduction <add>, %258, %cst_86 [1] : vector<32x512xf32> to vector<32xf32>
    %260 = vector.shape_cast %259 : vector<32xf32> to vector<32x1xf32>
    %cst_87 = arith.constant 5.120000e+02 : f32
    %261 = vector.broadcast %cst_87 : f32 to vector<32x1xf32>
    %262 = arith.divf %260, %261 : vector<32x1xf32>
    %263 = math.sqrt %262 : vector<32x1xf32>
    %cst_88 = arith.constant 9.99999997E-7 : f32
    %264 = vector.broadcast %cst_88 : f32 to vector<32x1xf32>
    %265 = arith.addf %263, %264 : vector<32x1xf32>
    %cst_89 = arith.constant 1.000000e+00 : f32
    %266 = vector.broadcast %cst_89 : f32 to vector<32x1xf32>
    %267 = arith.divf %266, %265 : vector<32x1xf32>
    %268 = vector.broadcast %267 : vector<32x1xf32> to vector<32x512xf32>
    %269 = arith.mulf %257, %268 : vector<32x512xf32>
    %cst_90 = arith.constant 0.000000e+00 : f32
    %270 = vector.broadcast %cst_90 : f32 to vector<32x512xf32>
    %271 = arith.maximumf %269, %270 : vector<32x512xf32>
    %c0_91 = arith.constant 0 : index
    %c0_92 = arith.constant 0 : index
    %272 = vector.load %arg4[%c0_91, %c0_92] : memref<32x32xbf16, #tpu.memory_space<vmem>>, vector<32x32xbf16>
    %273 = arith.truncf %271 : vector<32x512xf32> to vector<32x512xbf16>
    %cst_93 = arith.constant dense<0.000000e+00> : vector<32x512xf32>
    %274 = tpu.matmul %272, %273, %cst_93 {dimension_numbers = #tpu.dot_dimension_numbers<[1], [0], [0], [1], [0, 0, 1, 1], [], []>} : vector<32x32xbf16>, vector<32x512xbf16>, vector<32x512xf32> -> vector<32x512xf32>
    %cst_94 = arith.constant dense<0.000000e+00> : vector<32xf32>
    %275 = vector.multi_reduction <add>, %274, %cst_94 [1] : vector<32x512xf32> to vector<32xf32>
    %276 = vector.shape_cast %275 : vector<32xf32> to vector<32x1xf32>
    %cst_95 = arith.constant 5.120000e+02 : f32
    %277 = vector.broadcast %cst_95 : f32 to vector<32x1xf32>
    %278 = arith.divf %276, %277 : vector<32x1xf32>
    %279 = vector.broadcast %278 : vector<32x1xf32> to vector<32x512xf32>
    %280 = arith.subf %274, %279 : vector<32x512xf32>
    %281 = arith.mulf %280, %280 : vector<32x512xf32>
    %cst_96 = arith.constant dense<0.000000e+00> : vector<32xf32>
    %282 = vector.multi_reduction <add>, %281, %cst_96 [1] : vector<32x512xf32> to vector<32xf32>
    %283 = vector.shape_cast %282 : vector<32xf32> to vector<32x1xf32>
    %cst_97 = arith.constant 5.120000e+02 : f32
    %284 = vector.broadcast %cst_97 : f32 to vector<32x1xf32>
    %285 = arith.divf %283, %284 : vector<32x1xf32>
    %286 = math.sqrt %285 : vector<32x1xf32>
    %cst_98 = arith.constant 9.99999997E-7 : f32
    %287 = vector.broadcast %cst_98 : f32 to vector<32x1xf32>
    %288 = arith.addf %286, %287 : vector<32x1xf32>
    %cst_99 = arith.constant 1.000000e+00 : f32
    %289 = vector.broadcast %cst_99 : f32 to vector<32x1xf32>
    %290 = arith.divf %289, %288 : vector<32x1xf32>
    %291 = vector.broadcast %290 : vector<32x1xf32> to vector<32x512xf32>
    %292 = arith.mulf %280, %291 : vector<32x512xf32>
    %cst_100 = arith.constant 0.000000e+00 : f32
    %293 = vector.broadcast %cst_100 : f32 to vector<32x512xf32>
    %294 = arith.maximumf %292, %293 : vector<32x512xf32>
    %c0_101 = arith.constant 0 : index
    %c0_102 = arith.constant 0 : index
    %295 = vector.load %arg5[%c0_101, %c0_102] : memref<36x32xbf16, #tpu.memory_space<vmem>>, vector<36x32xbf16>
    %296 = arith.truncf %294 : vector<32x512xf32> to vector<32x512xbf16>
    %cst_103 = arith.constant dense<0.000000e+00> : vector<36x512xf32>
    %297 = tpu.matmul %295, %296, %cst_103 {dimension_numbers = #tpu.dot_dimension_numbers<[1], [0], [0], [1], [0, 0, 1, 1], [], []>} : vector<36x32xbf16>, vector<32x512xbf16>, vector<36x512xf32> -> vector<36x512xf32>
    %298 = vector.extract_strided_slice %297 {offsets = [16, 0], sizes = [4, 512], strides = [1, 1]} : vector<36x512xf32> to vector<4x512xf32>
    %299 = vector.extract_strided_slice %297 {offsets = [0, 0], sizes = [4, 512], strides = [1, 1]} : vector<36x512xf32> to vector<4x512xf32>
    %300 = vector.extract_strided_slice %299 {offsets = [0, 495], sizes = [4, 17], strides = [1, 1]} : vector<4x512xf32> to vector<4x17xf32>
    %301 = vector.extract_strided_slice %299 {offsets = [0, 0], sizes = [4, 495], strides = [1, 1]} : vector<4x512xf32> to vector<4x495xf32>
    %302 = tpu.concatenate %300, %301 in 1 : vector<4x17xf32>, vector<4x495xf32> -> vector<4x512xf32>
    %c-1_i32_104 = arith.constant -1 : i32
    %303 = vector.broadcast %c-1_i32_104 : i32 to vector<1x512xi32>
    %304 = arith.addi %7, %303 : vector<1x512xi32>
    %c0_i32_105 = arith.constant 0 : i32
    %305 = vector.broadcast %c0_i32_105 : i32 to vector<1x512xi32>
    %306 = arith.cmpi sge, %304, %305 : vector<1x512xi32>
    %c-1_i32_106 = arith.constant -1 : i32
    %307 = vector.broadcast %c-1_i32_106 : i32 to vector<1x512xi32>
    %308 = arith.addi %7, %307 : vector<1x512xi32>
    %c16_i32_107 = arith.constant 16 : i32
    %309 = vector.broadcast %c16_i32_107 : i32 to vector<1x512xi32>
    %310 = arith.cmpi slt, %308, %309 : vector<1x512xi32>
    %311 = arith.andi %306, %310 : vector<1x512xi1>
    %c-1_i32_108 = arith.constant -1 : i32
    %312 = vector.broadcast %c-1_i32_108 : i32 to vector<1x512xi32>
    %313 = arith.addi %3, %312 : vector<1x512xi32>
    %c0_i32_109 = arith.constant 0 : i32
    %314 = vector.broadcast %c0_i32_109 : i32 to vector<1x512xi32>
    %315 = arith.cmpi sge, %313, %314 : vector<1x512xi32>
    %316 = arith.andi %311, %315 : vector<1x512xi1>
    %c-1_i32_110 = arith.constant -1 : i32
    %317 = vector.broadcast %c-1_i32_110 : i32 to vector<1x512xi32>
    %318 = arith.addi %3, %317 : vector<1x512xi32>
    %c16_i32_111 = arith.constant 16 : i32
    %319 = vector.broadcast %c16_i32_111 : i32 to vector<1x512xi32>
    %320 = arith.cmpi slt, %318, %319 : vector<1x512xi32>
    %321 = arith.andi %316, %320 : vector<1x512xi1>
    %cst_112 = arith.constant 0.000000e+00 : f32
    %322 = vector.shape_cast %321 : vector<1x512xi1> to vector<1x512xi1>
    %323 = vector.broadcast %322 : vector<1x512xi1> to vector<4x512xi1>
    %324 = vector.broadcast %cst_112 : f32 to vector<4x512xf32>
    %325 = arith.select %323, %302, %324 : vector<4x512xi1>, vector<4x512xf32>
    %326 = arith.addf %298, %325 : vector<4x512xf32>
    %327 = vector.extract_strided_slice %297 {offsets = [4, 0], sizes = [4, 512], strides = [1, 1]} : vector<36x512xf32> to vector<4x512xf32>
    %328 = vector.extract_strided_slice %327 {offsets = [0, 496], sizes = [4, 16], strides = [1, 1]} : vector<4x512xf32> to vector<4x16xf32>
    %329 = vector.extract_strided_slice %327 {offsets = [0, 0], sizes = [4, 496], strides = [1, 1]} : vector<4x512xf32> to vector<4x496xf32>
    %330 = tpu.concatenate %328, %329 in 1 : vector<4x16xf32>, vector<4x496xf32> -> vector<4x512xf32>
    %c-1_i32_113 = arith.constant -1 : i32
    %331 = vector.broadcast %c-1_i32_113 : i32 to vector<1x512xi32>
    %332 = arith.addi %7, %331 : vector<1x512xi32>
    %c0_i32_114 = arith.constant 0 : i32
    %333 = vector.broadcast %c0_i32_114 : i32 to vector<1x512xi32>
    %334 = arith.cmpi sge, %332, %333 : vector<1x512xi32>
    %c-1_i32_115 = arith.constant -1 : i32
    %335 = vector.broadcast %c-1_i32_115 : i32 to vector<1x512xi32>
    %336 = arith.addi %7, %335 : vector<1x512xi32>
    %c16_i32_116 = arith.constant 16 : i32
    %337 = vector.broadcast %c16_i32_116 : i32 to vector<1x512xi32>
    %338 = arith.cmpi slt, %336, %337 : vector<1x512xi32>
    %339 = arith.andi %334, %338 : vector<1x512xi1>
    %c0_i32_117 = arith.constant 0 : i32
    %340 = vector.broadcast %c0_i32_117 : i32 to vector<1x512xi32>
    %341 = arith.addi %3, %340 : vector<1x512xi32>
    %c0_i32_118 = arith.constant 0 : i32
    %342 = vector.broadcast %c0_i32_118 : i32 to vector<1x512xi32>
    %343 = arith.cmpi sge, %341, %342 : vector<1x512xi32>
    %344 = arith.andi %339, %343 : vector<1x512xi1>
    %c0_i32_119 = arith.constant 0 : i32
    %345 = vector.broadcast %c0_i32_119 : i32 to vector<1x512xi32>
    %346 = arith.addi %3, %345 : vector<1x512xi32>
    %c16_i32_120 = arith.constant 16 : i32
    %347 = vector.broadcast %c16_i32_120 : i32 to vector<1x512xi32>
    %348 = arith.cmpi slt, %346, %347 : vector<1x512xi32>
    %349 = arith.andi %344, %348 : vector<1x512xi1>
    %cst_121 = arith.constant 0.000000e+00 : f32
    %350 = vector.shape_cast %349 : vector<1x512xi1> to vector<1x512xi1>
    %351 = vector.broadcast %350 : vector<1x512xi1> to vector<4x512xi1>
    %352 = vector.broadcast %cst_121 : f32 to vector<4x512xf32>
    %353 = arith.select %351, %330, %352 : vector<4x512xi1>, vector<4x512xf32>
    %354 = arith.addf %326, %353 : vector<4x512xf32>
    %355 = vector.extract_strided_slice %297 {offsets = [8, 0], sizes = [4, 512], strides = [1, 1]} : vector<36x512xf32> to vector<4x512xf32>
    %356 = vector.extract_strided_slice %355 {offsets = [0, 497], sizes = [4, 15], strides = [1, 1]} : vector<4x512xf32> to vector<4x15xf32>
    %357 = vector.extract_strided_slice %355 {offsets = [0, 0], sizes = [4, 497], strides = [1, 1]} : vector<4x512xf32> to vector<4x497xf32>
    %358 = tpu.concatenate %356, %357 in 1 : vector<4x15xf32>, vector<4x497xf32> -> vector<4x512xf32>
    %c-1_i32_122 = arith.constant -1 : i32
    %359 = vector.broadcast %c-1_i32_122 : i32 to vector<1x512xi32>
    %360 = arith.addi %7, %359 : vector<1x512xi32>
    %c0_i32_123 = arith.constant 0 : i32
    %361 = vector.broadcast %c0_i32_123 : i32 to vector<1x512xi32>
    %362 = arith.cmpi sge, %360, %361 : vector<1x512xi32>
    %c-1_i32_124 = arith.constant -1 : i32
    %363 = vector.broadcast %c-1_i32_124 : i32 to vector<1x512xi32>
    %364 = arith.addi %7, %363 : vector<1x512xi32>
    %c16_i32_125 = arith.constant 16 : i32
    %365 = vector.broadcast %c16_i32_125 : i32 to vector<1x512xi32>
    %366 = arith.cmpi slt, %364, %365 : vector<1x512xi32>
    %367 = arith.andi %362, %366 : vector<1x512xi1>
    %c1_i32_126 = arith.constant 1 : i32
    %368 = vector.broadcast %c1_i32_126 : i32 to vector<1x512xi32>
    %369 = arith.addi %3, %368 : vector<1x512xi32>
    %c0_i32_127 = arith.constant 0 : i32
    %370 = vector.broadcast %c0_i32_127 : i32 to vector<1x512xi32>
    %371 = arith.cmpi sge, %369, %370 : vector<1x512xi32>
    %372 = arith.andi %367, %371 : vector<1x512xi1>
    %c1_i32_128 = arith.constant 1 : i32
    %373 = vector.broadcast %c1_i32_128 : i32 to vector<1x512xi32>
    %374 = arith.addi %3, %373 : vector<1x512xi32>
    %c16_i32_129 = arith.constant 16 : i32
    %375 = vector.broadcast %c16_i32_129 : i32 to vector<1x512xi32>
    %376 = arith.cmpi slt, %374, %375 : vector<1x512xi32>
    %377 = arith.andi %372, %376 : vector<1x512xi1>
    %cst_130 = arith.constant 0.000000e+00 : f32
    %378 = vector.shape_cast %377 : vector<1x512xi1> to vector<1x512xi1>
    %379 = vector.broadcast %378 : vector<1x512xi1> to vector<4x512xi1>
    %380 = vector.broadcast %cst_130 : f32 to vector<4x512xf32>
    %381 = arith.select %379, %358, %380 : vector<4x512xi1>, vector<4x512xf32>
    %382 = arith.addf %354, %381 : vector<4x512xf32>
    %383 = vector.extract_strided_slice %297 {offsets = [12, 0], sizes = [4, 512], strides = [1, 1]} : vector<36x512xf32> to vector<4x512xf32>
    %384 = vector.extract_strided_slice %383 {offsets = [0, 511], sizes = [4, 1], strides = [1, 1]} : vector<4x512xf32> to vector<4x1xf32>
    %385 = vector.extract_strided_slice %383 {offsets = [0, 0], sizes = [4, 511], strides = [1, 1]} : vector<4x512xf32> to vector<4x511xf32>
    %386 = tpu.concatenate %384, %385 in 1 : vector<4x1xf32>, vector<4x511xf32> -> vector<4x512xf32>
    %c0_i32_131 = arith.constant 0 : i32
    %387 = vector.broadcast %c0_i32_131 : i32 to vector<1x512xi32>
    %388 = arith.addi %7, %387 : vector<1x512xi32>
    %c0_i32_132 = arith.constant 0 : i32
    %389 = vector.broadcast %c0_i32_132 : i32 to vector<1x512xi32>
    %390 = arith.cmpi sge, %388, %389 : vector<1x512xi32>
    %c0_i32_133 = arith.constant 0 : i32
    %391 = vector.broadcast %c0_i32_133 : i32 to vector<1x512xi32>
    %392 = arith.addi %7, %391 : vector<1x512xi32>
    %c16_i32_134 = arith.constant 16 : i32
    %393 = vector.broadcast %c16_i32_134 : i32 to vector<1x512xi32>
    %394 = arith.cmpi slt, %392, %393 : vector<1x512xi32>
    %395 = arith.andi %390, %394 : vector<1x512xi1>
    %c-1_i32_135 = arith.constant -1 : i32
    %396 = vector.broadcast %c-1_i32_135 : i32 to vector<1x512xi32>
    %397 = arith.addi %3, %396 : vector<1x512xi32>
    %c0_i32_136 = arith.constant 0 : i32
    %398 = vector.broadcast %c0_i32_136 : i32 to vector<1x512xi32>
    %399 = arith.cmpi sge, %397, %398 : vector<1x512xi32>
    %400 = arith.andi %395, %399 : vector<1x512xi1>
    %c-1_i32_137 = arith.constant -1 : i32
    %401 = vector.broadcast %c-1_i32_137 : i32 to vector<1x512xi32>
    %402 = arith.addi %3, %401 : vector<1x512xi32>
    %c16_i32_138 = arith.constant 16 : i32
    %403 = vector.broadcast %c16_i32_138 : i32 to vector<1x512xi32>
    %404 = arith.cmpi slt, %402, %403 : vector<1x512xi32>
    %405 = arith.andi %400, %404 : vector<1x512xi1>
    %cst_139 = arith.constant 0.000000e+00 : f32
    %406 = vector.shape_cast %405 : vector<1x512xi1> to vector<1x512xi1>
    %407 = vector.broadcast %406 : vector<1x512xi1> to vector<4x512xi1>
    %408 = vector.broadcast %cst_139 : f32 to vector<4x512xf32>
    %409 = arith.select %407, %386, %408 : vector<4x512xi1>, vector<4x512xf32>
    %410 = arith.addf %382, %409 : vector<4x512xf32>
    %411 = vector.extract_strided_slice %297 {offsets = [20, 0], sizes = [4, 512], strides = [1, 1]} : vector<36x512xf32> to vector<4x512xf32>
    %412 = vector.extract_strided_slice %411 {offsets = [0, 1], sizes = [4, 511], strides = [1, 1]} : vector<4x512xf32> to vector<4x511xf32>
    %413 = vector.extract_strided_slice %411 {offsets = [0, 0], sizes = [4, 1], strides = [1, 1]} : vector<4x512xf32> to vector<4x1xf32>
    %414 = tpu.concatenate %412, %413 in 1 : vector<4x511xf32>, vector<4x1xf32> -> vector<4x512xf32>
    %c0_i32_140 = arith.constant 0 : i32
    %415 = vector.broadcast %c0_i32_140 : i32 to vector<1x512xi32>
    %416 = arith.addi %7, %415 : vector<1x512xi32>
    %c0_i32_141 = arith.constant 0 : i32
    %417 = vector.broadcast %c0_i32_141 : i32 to vector<1x512xi32>
    %418 = arith.cmpi sge, %416, %417 : vector<1x512xi32>
    %c0_i32_142 = arith.constant 0 : i32
    %419 = vector.broadcast %c0_i32_142 : i32 to vector<1x512xi32>
    %420 = arith.addi %7, %419 : vector<1x512xi32>
    %c16_i32_143 = arith.constant 16 : i32
    %421 = vector.broadcast %c16_i32_143 : i32 to vector<1x512xi32>
    %422 = arith.cmpi slt, %420, %421 : vector<1x512xi32>
    %423 = arith.andi %418, %422 : vector<1x512xi1>
    %c1_i32_144 = arith.constant 1 : i32
    %424 = vector.broadcast %c1_i32_144 : i32 to vector<1x512xi32>
    %425 = arith.addi %3, %424 : vector<1x512xi32>
    %c0_i32_145 = arith.constant 0 : i32
    %426 = vector.broadcast %c0_i32_145 : i32 to vector<1x512xi32>
    %427 = arith.cmpi sge, %425, %426 : vector<1x512xi32>
    %428 = arith.andi %423, %427 : vector<1x512xi1>
    %c1_i32_146 = arith.constant 1 : i32
    %429 = vector.broadcast %c1_i32_146 : i32 to vector<1x512xi32>
    %430 = arith.addi %3, %429 : vector<1x512xi32>
    %c16_i32_147 = arith.constant 16 : i32
    %431 = vector.broadcast %c16_i32_147 : i32 to vector<1x512xi32>
    %432 = arith.cmpi slt, %430, %431 : vector<1x512xi32>
    %433 = arith.andi %428, %432 : vector<1x512xi1>
    %cst_148 = arith.constant 0.000000e+00 : f32
    %434 = vector.shape_cast %433 : vector<1x512xi1> to vector<1x512xi1>
    %435 = vector.broadcast %434 : vector<1x512xi1> to vector<4x512xi1>
    %436 = vector.broadcast %cst_148 : f32 to vector<4x512xf32>
    %437 = arith.select %435, %414, %436 : vector<4x512xi1>, vector<4x512xf32>
    %438 = arith.addf %410, %437 : vector<4x512xf32>
    %439 = vector.extract_strided_slice %297 {offsets = [24, 0], sizes = [4, 512], strides = [1, 1]} : vector<36x512xf32> to vector<4x512xf32>
    %440 = vector.extract_strided_slice %439 {offsets = [0, 15], sizes = [4, 497], strides = [1, 1]} : vector<4x512xf32> to vector<4x497xf32>
    %441 = vector.extract_strided_slice %439 {offsets = [0, 0], sizes = [4, 15], strides = [1, 1]} : vector<4x512xf32> to vector<4x15xf32>
    %442 = tpu.concatenate %440, %441 in 1 : vector<4x497xf32>, vector<4x15xf32> -> vector<4x512xf32>
    %c1_i32_149 = arith.constant 1 : i32
    %443 = vector.broadcast %c1_i32_149 : i32 to vector<1x512xi32>
    %444 = arith.addi %7, %443 : vector<1x512xi32>
    %c0_i32_150 = arith.constant 0 : i32
    %445 = vector.broadcast %c0_i32_150 : i32 to vector<1x512xi32>
    %446 = arith.cmpi sge, %444, %445 : vector<1x512xi32>
    %c1_i32_151 = arith.constant 1 : i32
    %447 = vector.broadcast %c1_i32_151 : i32 to vector<1x512xi32>
    %448 = arith.addi %7, %447 : vector<1x512xi32>
    %c16_i32_152 = arith.constant 16 : i32
    %449 = vector.broadcast %c16_i32_152 : i32 to vector<1x512xi32>
    %450 = arith.cmpi slt, %448, %449 : vector<1x512xi32>
    %451 = arith.andi %446, %450 : vector<1x512xi1>
    %c-1_i32_153 = arith.constant -1 : i32
    %452 = vector.broadcast %c-1_i32_153 : i32 to vector<1x512xi32>
    %453 = arith.addi %3, %452 : vector<1x512xi32>
    %c0_i32_154 = arith.constant 0 : i32
    %454 = vector.broadcast %c0_i32_154 : i32 to vector<1x512xi32>
    %455 = arith.cmpi sge, %453, %454 : vector<1x512xi32>
    %456 = arith.andi %451, %455 : vector<1x512xi1>
    %c-1_i32_155 = arith.constant -1 : i32
    %457 = vector.broadcast %c-1_i32_155 : i32 to vector<1x512xi32>
    %458 = arith.addi %3, %457 : vector<1x512xi32>
    %c16_i32_156 = arith.constant 16 : i32
    %459 = vector.broadcast %c16_i32_156 : i32 to vector<1x512xi32>
    %460 = arith.cmpi slt, %458, %459 : vector<1x512xi32>
    %461 = arith.andi %456, %460 : vector<1x512xi1>
    %cst_157 = arith.constant 0.000000e+00 : f32
    %462 = vector.shape_cast %461 : vector<1x512xi1> to vector<1x512xi1>
    %463 = vector.broadcast %462 : vector<1x512xi1> to vector<4x512xi1>
    %464 = vector.broadcast %cst_157 : f32 to vector<4x512xf32>
    %465 = arith.select %463, %442, %464 : vector<4x512xi1>, vector<4x512xf32>
    %466 = arith.addf %438, %465 : vector<4x512xf32>
    %467 = vector.extract_strided_slice %297 {offsets = [28, 0], sizes = [4, 512], strides = [1, 1]} : vector<36x512xf32> to vector<4x512xf32>
    %468 = vector.extract_strided_slice %467 {offsets = [0, 16], sizes = [4, 496], strides = [1, 1]} : vector<4x512xf32> to vector<4x496xf32>
    %469 = vector.extract_strided_slice %467 {offsets = [0, 0], sizes = [4, 16], strides = [1, 1]} : vector<4x512xf32> to vector<4x16xf32>
    %470 = tpu.concatenate %468, %469 in 1 : vector<4x496xf32>, vector<4x16xf32> -> vector<4x512xf32>
    %c1_i32_158 = arith.constant 1 : i32
    %471 = vector.broadcast %c1_i32_158 : i32 to vector<1x512xi32>
    %472 = arith.addi %7, %471 : vector<1x512xi32>
    %c0_i32_159 = arith.constant 0 : i32
    %473 = vector.broadcast %c0_i32_159 : i32 to vector<1x512xi32>
    %474 = arith.cmpi sge, %472, %473 : vector<1x512xi32>
    %c1_i32_160 = arith.constant 1 : i32
    %475 = vector.broadcast %c1_i32_160 : i32 to vector<1x512xi32>
    %476 = arith.addi %7, %475 : vector<1x512xi32>
    %c16_i32_161 = arith.constant 16 : i32
    %477 = vector.broadcast %c16_i32_161 : i32 to vector<1x512xi32>
    %478 = arith.cmpi slt, %476, %477 : vector<1x512xi32>
    %479 = arith.andi %474, %478 : vector<1x512xi1>
    %c0_i32_162 = arith.constant 0 : i32
    %480 = vector.broadcast %c0_i32_162 : i32 to vector<1x512xi32>
    %481 = arith.addi %3, %480 : vector<1x512xi32>
    %c0_i32_163 = arith.constant 0 : i32
    %482 = vector.broadcast %c0_i32_163 : i32 to vector<1x512xi32>
    %483 = arith.cmpi sge, %481, %482 : vector<1x512xi32>
    %484 = arith.andi %479, %483 : vector<1x512xi1>
    %c0_i32_164 = arith.constant 0 : i32
    %485 = vector.broadcast %c0_i32_164 : i32 to vector<1x512xi32>
    %486 = arith.addi %3, %485 : vector<1x512xi32>
    %c16_i32_165 = arith.constant 16 : i32
    %487 = vector.broadcast %c16_i32_165 : i32 to vector<1x512xi32>
    %488 = arith.cmpi slt, %486, %487 : vector<1x512xi32>
    %489 = arith.andi %484, %488 : vector<1x512xi1>
    %cst_166 = arith.constant 0.000000e+00 : f32
    %490 = vector.shape_cast %489 : vector<1x512xi1> to vector<1x512xi1>
    %491 = vector.broadcast %490 : vector<1x512xi1> to vector<4x512xi1>
    %492 = vector.broadcast %cst_166 : f32 to vector<4x512xf32>
    %493 = arith.select %491, %470, %492 : vector<4x512xi1>, vector<4x512xf32>
    %494 = arith.addf %466, %493 : vector<4x512xf32>
    %495 = vector.extract_strided_slice %297 {offsets = [32, 0], sizes = [4, 512], strides = [1, 1]} : vector<36x512xf32> to vector<4x512xf32>
    %496 = vector.extract_strided_slice %495 {offsets = [0, 17], sizes = [4, 495], strides = [1, 1]} : vector<4x512xf32> to vector<4x495xf32>
    %497 = vector.extract_strided_slice %495 {offsets = [0, 0], sizes = [4, 17], strides = [1, 1]} : vector<4x512xf32> to vector<4x17xf32>
    %498 = tpu.concatenate %496, %497 in 1 : vector<4x495xf32>, vector<4x17xf32> -> vector<4x512xf32>
    %c1_i32_167 = arith.constant 1 : i32
    %499 = vector.broadcast %c1_i32_167 : i32 to vector<1x512xi32>
    %500 = arith.addi %7, %499 : vector<1x512xi32>
    %c0_i32_168 = arith.constant 0 : i32
    %501 = vector.broadcast %c0_i32_168 : i32 to vector<1x512xi32>
    %502 = arith.cmpi sge, %500, %501 : vector<1x512xi32>
    %c1_i32_169 = arith.constant 1 : i32
    %503 = vector.broadcast %c1_i32_169 : i32 to vector<1x512xi32>
    %504 = arith.addi %7, %503 : vector<1x512xi32>
    %c16_i32_170 = arith.constant 16 : i32
    %505 = vector.broadcast %c16_i32_170 : i32 to vector<1x512xi32>
    %506 = arith.cmpi slt, %504, %505 : vector<1x512xi32>
    %507 = arith.andi %502, %506 : vector<1x512xi1>
    %c1_i32_171 = arith.constant 1 : i32
    %508 = vector.broadcast %c1_i32_171 : i32 to vector<1x512xi32>
    %509 = arith.addi %3, %508 : vector<1x512xi32>
    %c0_i32_172 = arith.constant 0 : i32
    %510 = vector.broadcast %c0_i32_172 : i32 to vector<1x512xi32>
    %511 = arith.cmpi sge, %509, %510 : vector<1x512xi32>
    %512 = arith.andi %507, %511 : vector<1x512xi1>
    %c1_i32_173 = arith.constant 1 : i32
    %513 = vector.broadcast %c1_i32_173 : i32 to vector<1x512xi32>
    %514 = arith.addi %3, %513 : vector<1x512xi32>
    %c16_i32_174 = arith.constant 16 : i32
    %515 = vector.broadcast %c16_i32_174 : i32 to vector<1x512xi32>
    %516 = arith.cmpi slt, %514, %515 : vector<1x512xi32>
    %517 = arith.andi %512, %516 : vector<1x512xi1>
    %cst_175 = arith.constant 0.000000e+00 : f32
    %518 = vector.shape_cast %517 : vector<1x512xi1> to vector<1x512xi1>
    %519 = vector.broadcast %518 : vector<1x512xi1> to vector<4x512xi1>
    %520 = vector.broadcast %cst_175 : f32 to vector<4x512xf32>
    %521 = arith.select %519, %498, %520 : vector<4x512xi1>, vector<4x512xf32>
    %522 = arith.addf %494, %521 : vector<4x512xf32>
    %c0_176 = arith.constant 0 : index
    %c0_177 = arith.constant 0 : index
    %523 = vector.load %arg6[%c0_176, %c0_177] : memref<4x1xf32, #tpu.memory_space<vmem>>, vector<4x1xf32>
    %524 = vector.broadcast %523 : vector<4x1xf32> to vector<4x512xf32>
    %525 = arith.addf %522, %524 : vector<4x512xf32>
    %526 = vector.extract_strided_slice %525 {offsets = [0, 0], sizes = [2, 512], strides = [1, 1]} : vector<4x512xf32> to vector<2x512xf32>
    %527 = vector.extract_strided_slice %525 {offsets = [2, 0], sizes = [2, 512], strides = [1, 1]} : vector<4x512xf32> to vector<2x512xf32>
    %cst_178 = arith.constant 2.000000e+00 : f32
    %528 = vector.broadcast %cst_178 : f32 to vector<2x512xf32>
    %529 = arith.addf %527, %528 : vector<2x512xf32>
    %530 = math.absf %529 : vector<2x512xf32>
    %cst_179 = arith.constant 0.000000e+00 : f32
    %531 = vector.broadcast %cst_179 : f32 to vector<2x512xf32>
    %532 = arith.subf %531, %530 : vector<2x512xf32>
    %533 = math.exp %532 : vector<2x512xf32>
    %cst_180 = arith.constant 1.000000e+00 : f32
    %534 = vector.broadcast %cst_180 : f32 to vector<2x512xf32>
    %535 = arith.addf %534, %533 : vector<2x512xf32>
    %cst_181 = arith.constant 1.000000e+00 : f32
    %536 = vector.broadcast %cst_181 : f32 to vector<2x512xf32>
    %537 = arith.divf %536, %535 : vector<2x512xf32>
    %cst_182 = arith.constant 0.000000e+00 : f32
    %538 = vector.broadcast %cst_182 : f32 to vector<2x512xf32>
    %539 = arith.cmpf oge, %529, %538 : vector<2x512xf32>
    %540 = arith.mulf %533, %537 : vector<2x512xf32>
    %541 = arith.select %539, %537, %540 : vector<2x512xi1>, vector<2x512xf32>
    %cst_183 = arith.constant 0.000000e+00 : f32
    %542 = vector.broadcast %cst_183 : f32 to vector<2x512xf32>
    %543 = arith.minimumf %529, %542 : vector<2x512xf32>
    %cst_184 = arith.constant 1.000000e+00 : f32
    %544 = vector.broadcast %cst_184 : f32 to vector<2x512xf32>
    %545 = arith.addf %544, %533 : vector<2x512xf32>
    %546 = math.log %545 : vector<2x512xf32>
    %547 = arith.subf %543, %546 : vector<2x512xf32>
    %548 = arith.addf %38, %526 : vector<2x512xf32>
    %549 = arith.mulf %548, %541 : vector<2x512xf32>
    %c2 = arith.constant 2 : index
    %c0_185 = arith.constant 0 : index
    %550 = vector.load %arg8[%c2, %c0_185] : memref<4x512xf32, #tpu.memory_space<vmem>>, vector<2x512xf32>
    tpu.vector_store %arg8[%c2, %c0_185], %549 {strides = array<i32>} : memref<4x512xf32, #tpu.memory_space<vmem>>, vector<2x512xf32>,
    %cst_186 = arith.constant dense<0.000000e+00> : vector<512xf32>
    %551 = vector.multi_reduction <add>, %547, %cst_186 [0] : vector<2x512xf32> to vector<512xf32>
    %552 = vector.shape_cast %551 : vector<512xf32> to vector<1x512xf32>
    %553 = vector.extract_strided_slice %552 {offsets = [0, 0], sizes = [1, 256], strides = [1, 1]} : vector<1x512xf32> to vector<1x256xf32>
    %cst_187 = arith.constant dense<0.000000e+00> : vector<1xf32>
    %554 = vector.multi_reduction <add>, %553, %cst_187 [1] : vector<1x256xf32> to vector<1xf32>
    %555 = vector.shape_cast %554 : vector<1xf32> to vector<1x1xf32>
    %c0_188 = arith.constant 0 : index
    %c0_189 = arith.constant 0 : index
    %556 = vector.load %arg7[%c0_188, %c0_189] : memref<2x1xf32, #tpu.memory_space<vmem>>, vector<1x1xf32>
    %557 = arith.addf %556, %33 : vector<1x1xf32>
    %558 = arith.addf %557, %555 : vector<1x1xf32>
    %c0_190 = arith.constant 0 : index
    %c0_191 = arith.constant 0 : index
    %559 = vector.load %arg9[%c0_190, %c0_191] : memref<2x1xf32, #tpu.memory_space<vmem>>, vector<1x1xf32>
    tpu.vector_store %arg9[%c0_190, %c0_191], %558 {strides = array<i32>} : memref<2x1xf32, #tpu.memory_space<vmem>>, vector<1x1xf32>,
    %560 = vector.extract_strided_slice %552 {offsets = [0, 256], sizes = [1, 256], strides = [1, 1]} : vector<1x512xf32> to vector<1x256xf32>
    %cst_192 = arith.constant dense<0.000000e+00> : vector<1xf32>
    %561 = vector.multi_reduction <add>, %560, %cst_192 [1] : vector<1x256xf32> to vector<1xf32>
    %562 = vector.shape_cast %561 : vector<1xf32> to vector<1x1xf32>
    %c1 = arith.constant 1 : index
    %c0_193 = arith.constant 0 : index
    %563 = vector.load %arg7[%c1, %c0_193] : memref<2x1xf32, #tpu.memory_space<vmem>>, vector<1x1xf32>
    %564 = arith.addf %563, %33 : vector<1x1xf32>
    %565 = arith.addf %564, %562 : vector<1x1xf32>
    %c1_194 = arith.constant 1 : index
    %c0_195 = arith.constant 0 : index
    %566 = vector.load %arg9[%c1_194, %c0_195] : memref<2x1xf32, #tpu.memory_space<vmem>>, vector<1x1xf32>
    tpu.vector_store %arg9[%c1_194, %c0_195], %565 {strides = array<i32>} : memref<2x1xf32, #tpu.memory_space<vmem>>, vector<1x1xf32>,
    return
  }
  func.func @transform_0(%arg0: i32) -> (i32, i32) {
    %c0_i32 = arith.constant 0 : i32
    %c0_i32_0 = arith.constant 0 : i32
    %c0_i32_1 = arith.constant 0 : i32
    return %c0_i32, %c0_i32_0 : i32, i32
  }
  func.func @transform_1(%arg0: i32) -> (i32, i32) {
    %c0_i32 = arith.constant 0 : i32
    %c0_i32_0 = arith.constant 0 : i32
    %c0_i32_1 = arith.constant 0 : i32
    return %c0_i32, %c0_i32_0 : i32, i32
  }
  func.func @transform_2(%arg0: i32) -> (i32, i32) {
    %c0_i32 = arith.constant 0 : i32
    %c0_i32_0 = arith.constant 0 : i32
    %c0_i32_1 = arith.constant 0 : i32
    return %c0_i32, %c0_i32_0 : i32, i32
  }
  func.func @transform_3(%arg0: i32) -> (i32, i32) {
    %c0_i32 = arith.constant 0 : i32
    %c0_i32_0 = arith.constant 0 : i32
    %c0_i32_1 = arith.constant 0 : i32
    return %c0_i32, %c0_i32_0 : i32, i32
  }
  func.func @transform_4(%arg0: i32) -> (i32, i32) {
    %c0_i32 = arith.constant 0 : i32
    %c0_i32_0 = arith.constant 0 : i32
    %c0_i32_1 = arith.constant 0 : i32
    return %c0_i32, %c0_i32_0 : i32, i32
  }
  func.func @transform_5(%arg0: i32) -> (i32, i32) {
    %c0_i32 = arith.constant 0 : i32
    %c0_i32_0 = arith.constant 0 : i32
    %c0_i32_1 = arith.constant 0 : i32
    return %c0_i32, %c0_i32_0 : i32, i32
  }
  func.func @transform_6(%arg0: i32) -> (i32, i32) {
    %c0_i32 = arith.constant 0 : i32
    %c0_i32_0 = arith.constant 0 : i32
    %c0_i32_1 = arith.constant 0 : i32
    return %c0_i32, %c0_i32_0 : i32, i32
  }
  func.func @transform_7(%arg0: i32) -> (i32, i32) {
    %c0_i32 = arith.constant 0 : i32
    %c0_i32_0 = arith.constant 0 : i32
    %c0_i32_1 = arith.constant 0 : i32
    return %c0_i32, %c0_i32_0 : i32, i32
  }
  func.func @transform_8(%arg0: i32) -> (i32, i32) {
    %c0_i32 = arith.constant 0 : i32
    %c0_i32_0 = arith.constant 0 : i32
    %c0_i32_1 = arith.constant 0 : i32
    return %c0_i32, %c0_i32_0 : i32, i32
  }
}

</mosaic_0001>

<llo_original>
// kernel: tpu_custom_call.1
$region0: #{tpu_custom_call.1}
  #allocation0 [shape = 'u32[]', space=smem, size = 0x4, offset = 0x4, fixed_abs, tag = 'smem constant byte address 0x4 - core index']
  #allocation1 [shape = 'u32[144,128]{1,0:T(1,128)}', space=vmem, size = 0x12000, scoped, tag = 'internal scratch']
  %s0 = inlined_call_operand.vmem [shape: f32[4,512], index: 0, kind: input, shape index: {}]
  %s1 = inlined_call_operand.vmem [shape: bf16[4,4], index: 1, kind: input, shape index: {}]
  %s2 = inlined_call_operand.vmem [shape: bf16[32,18], index: 2, kind: input, shape index: {}]
  %s3 = inlined_call_operand.vmem [shape: bf16[32,32], index: 3, kind: input, shape index: {}]
  %s4 = inlined_call_operand.vmem [shape: bf16[36,32], index: 4, kind: input, shape index: {}]
  %s5 = inlined_call_operand.vmem [shape: f32[4,1], index: 5, kind: input, shape index: {}]
  %s6 = inlined_call_operand.vmem [shape: f32[2,1], index: 6, kind: input, shape index: {}]
  %s7 = inlined_call_operand.hbm [shape: f32[4,512], index: 7, kind: output, shape index: {0}]
  %s8 = inlined_call_operand.vmem [shape: f32[2,1], index: 8, kind: output, shape index: {1}]
  %9 = xla_tuple %s7, %s8
  %s10 = sld [smem:[#allocation0]]
  $region46: #{tpu_custom_call.1} parent=0
    _
  %s12 = ssub.s32 1, %s10
  %s13 = scalar_select 0, %s12, %s10
  $region1: #{tpu_custom_call.1} parent=0
    #allocation2 [shape = 'u8[8192]{0}', space=vmem, size = 0x2000, scoped, tag = 'output window, operand 0, single buffered']
    #allocation3 [shape = 's32[1]{0}', space=sflag, size = 0x4, scoped, tag = 'scoped memory for tpu_custom_call.1']
    %14 = vsyncpa [#allocation3], 0
    // Predicated region
    $region2: #{tpu_custom_call.1} parent=1 // pred_check
      _
    $region3: #{tpu_custom_call.1} parent=1 // pred_check_branch
      %16 = sbr.rel (0) target = $region5
    $region4: #{tpu_custom_call.1} parent=1 // pred_region
      _
    $region5: #{tpu_custom_call.1} parent=1 // pred_fallthru
      _
    // Predicated region
    $region6: #{tpu_custom_call.1} parent=1 // pred_check
      _
    $region7: #{tpu_custom_call.1} parent=1 // pred_check_branch
      %18 = sbr.rel (0) target = $region9
    $region8: #{tpu_custom_call.1} parent=1 // pred_region
      _
    $region9: #{tpu_custom_call.1} parent=1 // pred_fallthru
      _
    // Predicated region
    $region10: #{tpu_custom_call.1} parent=1 // pred_check
      _
    $region11: #{tpu_custom_call.1} parent=1 // pred_check_branch
      %20 = sbr.rel (0) target = $region13
    $region12: #{tpu_custom_call.1} parent=1 // pred_region
      _
    $region13: #{tpu_custom_call.1} parent=1 // pred_fallthru
      _
    // Predicated region
    $region14: #{tpu_custom_call.1} parent=1 // pred_check
      _
    $region15: #{tpu_custom_call.1} parent=1 // pred_check_branch
      %22 = sbr.rel (0) target = $region17
    $region16: #{tpu_custom_call.1} parent=1 // pred_region
      _
    $region17: #{tpu_custom_call.1} parent=1 // pred_fallthru
      _
    // Predicated region
    $region18: #{tpu_custom_call.1} parent=1 // pred_check
      _
    $region19: #{tpu_custom_call.1} parent=1 // pred_check_branch
      %24 = sbr.rel (0) target = $region21
    $region20: #{tpu_custom_call.1} parent=1 // pred_region
      _
    $region21: #{tpu_custom_call.1} parent=1 // pred_fallthru
      _
    // Predicated region
    $region22: #{tpu_custom_call.1} parent=1 // pred_check
      _
    $region23: #{tpu_custom_call.1} parent=1 // pred_check_branch
      %26 = sbr.rel (0) target = $region25
    $region24: #{tpu_custom_call.1} parent=1 // pred_region
      _
    $region25: #{tpu_custom_call.1} parent=1 // pred_fallthru
      _
    // Predicated region
    $region26: #{tpu_custom_call.1} parent=1 // pred_check
      _
    $region27: #{tpu_custom_call.1} parent=1 // pred_check_branch
      %28 = sbr.rel (0) target = $region29
    $region28: #{tpu_custom_call.1} parent=1 // pred_region
      _
    $region29: #{tpu_custom_call.1} parent=1 // pred_fallthru
      _
    %v30 = vld [vmem:[%s0] sm:$0xff]
    %v31 = vld [vmem:[%s0 + $0x8] sm:$0xff]
    %v32 = vlaneseq
    %v33 = vand.u32 %v32, 127
    %v34 = vadd.s32 %v33, 128
    %v35 = vadd.s32 %v33, 256
    %v36 = vadd.s32 %v33, 384
    %v37 = vand.u32 %v33, 15
    %v38 = vand.u32 %v34, 15
    %v39 = vand.u32 %v35, 15
    %v40 = vand.u32 %v36, 15
    %v41 = vand.u32 %v33, 255
    %v42 = vand.u32 %v34, 255
    %v43 = vand.u32 %v35, 255
    %v44 = vand.u32 %v36, 255
    %v45 = vshra.s32 %v41, 4
    %v46 = vshra.s32 %v42, 4
    %v47 = vshra.s32 %v43, 4
    %v48 = vshra.s32 %v44, 4
    %v51 = vcombine.high %v30, %v30
    %v52 = vcombine.high %v31, %v31
    %vm55 = vcmask 1043456
    %v56 = vsel %vm55, %v30, 0.0
    %v57 = vsel %vm55, %v51, 0.0
    %v58 = vadd.f32 %v56, %v57
    %v59 = vsel %vm55, %v31, 0.0
    %v60 = vadd.f32 %v58, %v59
    %v61 = vsel %vm55, %v52, 0.0
    %v62 = vadd.f32 %v60, %v61
    %63 = vadd.xlane.f32.xlu0 %v62
    %v64 = vpop.xlane.xlu0 %63
    %v65 = vrcp.pop 512.0
    %v66 = vmul.f32 %v64, %v65
    %v69 = vunpack.c.l.s4 839922192
    %v70 = vunpack.c.0.s8 %v69
    %v71 = vlaneseq
    %v72 = vshrl.u32 %v71, 7
    %v73 = vsub.s32 %v70, %v72
    %v74 = vrot.slane %v66, %v73
    %v76 = vsub.f32 %v30, %v74
    %v77 = vsub.f32 %v31, %v74
    %v78 = vmul.f32 %v76, %v76
    %v79 = vmul.f32 %v77, %v77
    %v82 = vcombine.high %v78, %v78
    %v83 = vcombine.high %v79, %v79
    %v86 = vsel %vm55, %v78, 0.0
    %v87 = vsel %vm55, %v82, 0.0
    %v88 = vadd.f32 %v86, %v87
    %v89 = vsel %vm55, %v79, 0.0
    %v90 = vadd.f32 %v88, %v89
    %v91 = vsel %vm55, %v83, 0.0
    %v92 = vadd.f32 %v90, %v91
    %93 = vadd.xlane.f32.xlu0 %v92
    %v94 = vpop.xlane.xlu0 %93
    %v95 = vmul.f32 %v94, %v65
    %v96 = vrsqrt.pop %v95
    %v97 = vmul.f32 %v95, %v96
    %vm98 = vcmp.eq.f32.partialorder %v95, inf
    %v99 = vsel %vm98, %v95, %v97
    %vm100 = vcmp.eq.f32.partialorder %v95, 0.0
    %v101 = vand.u32 %v95, 2147483648
    %v102 = vsel %vm100, %v101, %v99
    %v103 = vadd.f32 %v102, 1e-06
    %v104 = vrcp.pop %v103
    %v105 = vmul.f32 1.0, %v104
    %v106 = vlog2.pop %v105
    %v107 = vmul.f32 %v106, 0.6931472
    %v110 = vunpack.c.l.s4 839922192
    %v111 = vunpack.c.0.s8 %v110
    %v112 = vlaneseq
    %v113 = vshrl.u32 %v112, 7
    %v114 = vsub.s32 %v111, %v113
    %v115 = vrot.slane %v105, %v114
    %v117 = vmul.f32 %v76, %v115
    %v118 = vmul.f32 %v77, %v115
    %vm119 = vcmask 3072
    %v120 = vsel %vm119, %v107, 0.0
    %121 = vadd.xlane.f32.xlu0 %v120
    %v122 = vpop.xlane.xlu0 %121
    %v123 = vrot.slane %v122, 4
    %v124 = vadd.f32 %v122, %v123
    %v125 = vrot.slane %v124, 2
    %v126 = vadd.f32 %v124, %v125
    %v127 = vrot.slane %v126, 1
    %v128 = vadd.f32 %v126, %v127
    %s129 = vtos %v128
    %v130 = vstv %s129
    %v131 = vmul.f32 %v130, 256.0
    %v132 = vld [vmem:[%s1] sm:$0x3]
    %v135 = vcombine.high %v117, %v117
    %v136 = vcombine.high %v118, %v118
    %v139 = vpack.c.bf16 %v117, %v117
    %v140 = vpack.c.bf16 %v135, %v135
    %v141 = vpack.c.bf16 %v118, %v118
    %v142 = vpack.c.bf16 %v136, %v136
    %vm143 = vcmask 31744
    %v145 = vsel %vm143, %v132, 0
    %vm147 = vcmask 1041408
    %v149 = vsel %vm147, %v139, 0
    %v152 = vsel %vm147, %v140, 0
    %v155 = vsel %vm147, %v141, 0
    %v158 = vsel %vm147, %v142, 0
    %160 = vmatprep.subr.bf16.mxu0 %v152
    %161 = vmatpush1.bf16.msra.mxu0 %v149
    %162 = vmatprep.subr.bf16.mxu0 0
    %163 = vmatpush1.bf16.msra.mxu0 0
    %164 = vmatprep.subr.bf16.mxu0 0
    %165 = vmatpush1.bf16.msra.mxu0 0
    %166 = vmatprep.subr.bf16.mxu0 0
    %167 = vmatpush1.bf16.msra.mxu0 0
    %168 = vmatprep.subr.bf16.mxu0 0
    %169 = vmatpush1.bf16.msra.mxu0 0
    %170 = vmatprep.subr.bf16.mxu0 0
    %171 = vmatpush1.bf16.msra.mxu0 0
    %172 = vmatprep.subr.bf16.mxu0 0
    %173 = vmatpush1.bf16.msra.mxu0 0
    %174 = vmatprep.subr.bf16.mxu0 0
    %175 = vmatpush1.bf16.msra.mxu0 0
    %176 = vmatprep.subr.bf16.mxu0 0
    %177 = vmatpush1.bf16.msra.mxu0 0
    %178 = vmatprep.subr.bf16.mxu0 0
    %179 = vmatpush1.bf16.msra.mxu0 0
    %180 = vmatprep.subr.bf16.mxu0 0
    %181 = vmatpush1.bf16.msra.mxu0 0
    %182 = vmatprep.subr.bf16.mxu0 0
    %183 = vmatpush1.bf16.msra.mxu0 0
    %184 = vmatprep.subr.bf16.mxu0 0
    %185 = vmatpush1.bf16.msra.mxu0 0
    %186 = vmatprep.subr.bf16.mxu0 0
    %187 = vmatpush1.bf16.msra.mxu0 0
    %188 = vmatprep.subr.bf16.mxu0 0
    %189 = vmatpush1.bf16.msra.mxu0 0
    %190 = vmatprep.subr.bf16.mxu0 0
    %191 = vmatpush1.bf16.msra.mxu0 0
    %192 = vmatprep.mubr.bf16.mxu0 0
    %193 = vmatmul.mubr.bf16.gmra.mrb[0].mxu0 %v145
    %v194 = vpop.f32.mrb[0].mxu0
    %v195 = vadd.f32 0.0, %v194
    %v196 = vpop.f32.mrb[0].mxu0
    %v197 = vadd.f32 0.0, %v196
    %v198 = vpop.f32.mrb[0].mxu0
    %v199 = vpop.f32.mrb[0].mxu0
    %200 = vdwg.mxu0
    %201 = vmatprep.subr.bf16.mxu0 %v158
    %202 = vmatpush1.bf16.msra.mxu0 %v155
    %203 = vmatprep.subr.bf16.mxu0 0
    %204 = vmatpush1.bf16.msra.mxu0 0
    %205 = vmatprep.subr.bf16.mxu0 0
    %206 = vmatpush1.bf16.msra.mxu0 0
    %207 = vmatprep.subr.bf16.mxu0 0
    %208 = vmatpush1.bf16.msra.mxu0 0
    %209 = vmatprep.subr.bf16.mxu0 0
    %210 = vmatpush1.bf16.msra.mxu0 0
    %211 = vmatprep.subr.bf16.mxu0 0
    %212 = vmatpush1.bf16.msra.mxu0 0
    %213 = vmatprep.subr.bf16.mxu0 0
    %214 = vmatpush1.bf16.msra.mxu0 0
    %215 = vmatprep.subr.bf16.mxu0 0
    %216 = vmatpush1.bf16.msra.mxu0 0
    %217 = vmatprep.subr.bf16.mxu0 0
    %218 = vmatpush1.bf16.msra.mxu0 0
    %219 = vmatprep.subr.bf16.mxu0 0
    %220 = vmatpush1.bf16.msra.mxu0 0
    %221 = vmatprep.subr.bf16.mxu0 0
    %222 = vmatpush1.bf16.msra.mxu0 0
    %223 = vmatprep.subr.bf16.mxu0 0
    %224 = vmatpush1.bf16.msra.mxu0 0
    %225 = vmatprep.subr.bf16.mxu0 0
    %226 = vmatpush1.bf16.msra.mxu0 0
    %227 = vmatprep.subr.bf16.mxu0 0
    %228 = vmatpush1.bf16.msra.mxu0 0
    %229 = vmatprep.subr.bf16.mxu0 0
    %230 = vmatpush1.bf16.msra.mxu0 0
    %231 = vmatprep.subr.bf16.mxu0 0
    %232 = vmatpush1.bf16.msra.mxu0 0
    %233 = vmatprep.mubr.bf16.mxu0 0
    %234 = vmatmul.mubr.bf16.gmra.mrb[0].mxu0 %v145
    %v235 = vpop.f32.mrb[0].mxu0
    %v236 = vadd.f32 0.0, %v235
    %v237 = vpop.f32.mrb[0].mxu0
    %v238 = vadd.f32 0.0, %v237
    %v239 = vpop.f32.mrb[0].mxu0
    %v240 = vpop.f32.mrb[0].mxu0
    %241 = vdwg.mxu0
    %v246 = vcombine.low %v195, %v197
    %v247 = vcombine.low %v236, %v238
    %250 = vst [vmem:[#allocation2] sm:$0x33] %v246
    %251 = vst [vmem:[#allocation2 + $0x8] sm:$0x33] %v247
    %v252 = vadd.s32 %v45, 4294967295
    %v253 = vadd.s32 %v46, 4294967295
    %v254 = vadd.s32 %v47, 4294967295
    %v255 = vadd.s32 %v48, 4294967295
    %vm256 = vcmp.ge.s32.totalorder %v252, 0
    %vm257 = vcmp.ge.s32.totalorder %v253, 0
    %vm258 = vcmp.ge.s32.totalorder %v254, 0
    %vm259 = vcmp.ge.s32.totalorder %v255, 0
    %vm260 = vcmp.lt.s32.totalorder %v252, 16
    %vm261 = vcmp.lt.s32.totalorder %v253, 16
    %vm262 = vcmp.lt.s32.totalorder %v254, 16
    %vm263 = vcmp.lt.s32.totalorder %v255, 16
    %vm264 = vmand %vm256, %vm260
    %vm265 = vmand %vm257, %vm261
    %vm266 = vmand %vm258, %vm262
    %vm267 = vmand %vm259, %vm263
    %v268 = vadd.s32 %v37, 4294967295
    %v269 = vadd.s32 %v38, 4294967295
    %v270 = vadd.s32 %v39, 4294967295
    %v271 = vadd.s32 %v40, 4294967295
    %vm272 = vcmp.ge.s32.totalorder %v268, 0
    %vm273 = vcmp.ge.s32.totalorder %v269, 0
    %vm274 = vcmp.ge.s32.totalorder %v270, 0
    %vm275 = vcmp.ge.s32.totalorder %v271, 0
    %vm276 = vmand %vm264, %vm272
    %vm277 = vmand %vm265, %vm273
    %vm278 = vmand %vm266, %vm274
    %vm279 = vmand %vm267, %vm275
    %vm280 = vcmp.lt.s32.totalorder %v268, 16
    %vm281 = vcmp.lt.s32.totalorder %v269, 16
    %vm282 = vcmp.lt.s32.totalorder %v270, 16
    %vm283 = vcmp.lt.s32.totalorder %v271, 16
    %vm284 = vmand %vm276, %vm280
    %vm285 = vmand %vm277, %vm281
    %vm286 = vmand %vm278, %vm282
    %vm287 = vmand %vm279, %vm283
    %288 = vrot.lane.b32.xlu0 %v238, 17
    %v289 = vpop.permute.xlu0 %288
    %291 = vrot.lane.b32.xlu0 %v195, 17
    %v292 = vpop.permute.xlu0 %291
    %293 = vrot.lane.b32.xlu0 %v197, 17
    %v294 = vpop.permute.xlu0 %293
    %295 = vrot.lane.b32.xlu0 %v236, 17
    %v296 = vpop.permute.xlu0 %295
    %vm297 = vcmask 138240
    %v298 = vsel %vm297, %v292, %v294
    %v299 = vsel %vm297, %v294, %v296
    %v300 = vsel %vm297, %v296, %v289
    %v305 = vsel %vm297, %v289, %v292
    %v306 = vsel %vm284, 1, 0
    %v307 = vsel %vm285, 1, 0
    %v308 = vsel %vm286, 1, 0
    %v309 = vsel %vm287, 1, 0
    %vm310 = vcmp.eq.s32.totalorder %v306, 1
    %vm311 = vcmp.eq.s32.totalorder %v307, 1
    %vm312 = vcmp.eq.s32.totalorder %v308, 1
    %vm313 = vcmp.eq.s32.totalorder %v309, 1
    %v314 = vsel %vm310, %v305, 0.0
    %v315 = vsel %vm311, %v298, 0.0
    %v316 = vsel %vm312, %v299, 0.0
    %v317 = vsel %vm313, %v300, 0.0
    %vm318 = vcmp.ge.s32.totalorder %v37, 0
    %vm319 = vcmp.ge.s32.totalorder %v38, 0
    %vm320 = vcmp.ge.s32.totalorder %v39, 0
    %vm321 = vcmp.ge.s32.totalorder %v40, 0
    %vm322 = vmand %vm264, %vm318
    %vm323 = vmand %vm265, %vm319
    %vm324 = vmand %vm266, %vm320
    %vm325 = vmand %vm267, %vm321
    %vm326 = vcmp.lt.s32.totalorder %v37, 16
    %vm327 = vcmp.lt.s32.totalorder %v38, 16
    %vm328 = vcmp.lt.s32.totalorder %v39, 16
    %vm329 = vcmp.lt.s32.totalorder %v40, 16
    %vm330 = vmand %vm322, %vm326
    %vm331 = vmand %vm323, %vm327
    %vm332 = vmand %vm324, %vm328
    %vm333 = vmand %vm325, %vm329
    %334 = vrot.lane.b32.xlu0 %v238, 16
    %v335 = vpop.permute.xlu0 %334
    %337 = vrot.lane.b32.xlu0 %v195, 16
    %v338 = vpop.permute.xlu0 %337
    %339 = vrot.lane.b32.xlu0 %v197, 16
    %v340 = vpop.permute.xlu0 %339
    %341 = vrot.lane.b32.xlu0 %v236, 16
    %v342 = vpop.permute.xlu0 %341
    %vm343 = vcmask 130048
    %v344 = vsel %vm343, %v338, %v340
    %v345 = vsel %vm343, %v340, %v342
    %v346 = vsel %vm343, %v342, %v335
    %v351 = vsel %vm343, %v335, %v338
    %v352 = vsel %vm330, 1, 0
    %v353 = vsel %vm331, 1, 0
    %v354 = vsel %vm332, 1, 0
    %v355 = vsel %vm333, 1, 0
    %vm356 = vcmp.eq.s32.totalorder %v352, 1
    %vm357 = vcmp.eq.s32.totalorder %v353, 1
    %vm358 = vcmp.eq.s32.totalorder %v354, 1
    %vm359 = vcmp.eq.s32.totalorder %v355, 1
    %v360 = vsel %vm356, %v351, 0.0
    %v361 = vsel %vm357, %v344, 0.0
    %v362 = vsel %vm358, %v345, 0.0
    %v363 = vsel %vm359, %v346, 0.0
    %v364 = vadd.s32 %v37, 1
    %v365 = vadd.s32 %v38, 1
    %v366 = vadd.s32 %v39, 1
    %v367 = vadd.s32 %v40, 1
    %vm368 = vcmp.ge.s32.totalorder %v364, 0
    %vm369 = vcmp.ge.s32.totalorder %v365, 0
    %vm370 = vcmp.ge.s32.totalorder %v366, 0
    %vm371 = vcmp.ge.s32.totalorder %v367, 0
    %vm372 = vmand %vm264, %vm368
    %vm373 = vmand %vm265, %vm369
    %vm374 = vmand %vm266, %vm370
    %vm375 = vmand %vm267, %vm371
    %vm376 = vcmp.lt.s32.totalorder %v364, 16
    %vm377 = vcmp.lt.s32.totalorder %v365, 16
    %vm378 = vcmp.lt.s32.totalorder %v366, 16
    %vm379 = vcmp.lt.s32.totalorder %v367, 16
    %vm380 = vmand %vm372, %vm376
    %vm381 = vmand %vm373, %vm377
    %vm382 = vmand %vm374, %vm378
    %vm383 = vmand %vm375, %vm379
    %384 = vrot.lane.b32.xlu0 %v238, 15
    %v385 = vpop.permute.xlu0 %384
    %387 = vrot.lane.b32.xlu0 %v195, 15
    %v388 = vpop.permute.xlu0 %387
    %389 = vrot.lane.b32.xlu0 %v197, 15
    %v390 = vpop.permute.xlu0 %389
    %391 = vrot.lane.b32.xlu0 %v236, 15
    %v392 = vpop.permute.xlu0 %391
    %vm393 = vcmask 121856
    %v394 = vsel %vm393, %v388, %v390
    %v395 = vsel %vm393, %v390, %v392
    %v396 = vsel %vm393, %v392, %v385
    %v401 = vsel %vm393, %v385, %v388
    %v402 = vsel %vm380, 1, 0
    %v403 = vsel %vm381, 1, 0
    %v404 = vsel %vm382, 1, 0
    %v405 = vsel %vm383, 1, 0
    %vm406 = vcmp.eq.s32.totalorder %v402, 1
    %vm407 = vcmp.eq.s32.totalorder %v403, 1
    %vm408 = vcmp.eq.s32.totalorder %v404, 1
    %vm409 = vcmp.eq.s32.totalorder %v405, 1
    %v410 = vsel %vm406, %v401, 0.0
    %v411 = vsel %vm407, %v394, 0.0
    %v412 = vsel %vm408, %v395, 0.0
    %v413 = vsel %vm409, %v396, 0.0
    %vm414 = vcmp.ge.s32.totalorder %v45, 0
    %vm415 = vcmp.ge.s32.totalorder %v46, 0
    %vm416 = vcmp.ge.s32.totalorder %v47, 0
    %vm417 = vcmp.ge.s32.totalorder %v48, 0
    %vm418 = vcmp.lt.s32.totalorder %v45, 16
    %vm419 = vcmp.lt.s32.totalorder %v46, 16
    %vm420 = vcmp.lt.s32.totalorder %v47, 16
    %vm421 = vcmp.lt.s32.totalorder %v48, 16
    %vm422 = vmand %vm414, %vm418
    %vm423 = vmand %vm415, %vm419
    %vm424 = vmand %vm416, %vm420
    %vm425 = vmand %vm417, %vm421
    %vm426 = vmand %vm422, %vm272
    %vm427 = vmand %vm423, %vm273
    %vm428 = vmand %vm424, %vm274
    %vm429 = vmand %vm425, %vm275
    %vm430 = vmand %vm426, %vm280
    %vm431 = vmand %vm427, %vm281
    %vm432 = vmand %vm428, %vm282
    %vm433 = vmand %vm429, %vm283
    %434 = vrot.lane.b32.xlu0 %v238, 1
    %v435 = vpop.permute.xlu0 %434
    %437 = vrot.lane.b32.xlu0 %v195, 1
    %v438 = vpop.permute.xlu0 %437
    %439 = vrot.lane.b32.xlu0 %v197, 1
    %v440 = vpop.permute.xlu0 %439
    %441 = vrot.lane.b32.xlu0 %v236, 1
    %v442 = vpop.permute.xlu0 %441
    %vm443 = vcmask 7168
    %v444 = vsel %vm443, %v438, %v440
    %v445 = vsel %vm443, %v440, %v442
    %v446 = vsel %vm443, %v442, %v435
    %v451 = vsel %vm443, %v435, %v438
    %v452 = vsel %vm430, 1, 0
    %v453 = vsel %vm431, 1, 0
    %v454 = vsel %vm432, 1, 0
    %v455 = vsel %vm433, 1, 0
    %vm456 = vcmp.eq.s32.totalorder %v452, 1
    %vm457 = vcmp.eq.s32.totalorder %v453, 1
    %vm458 = vcmp.eq.s32.totalorder %v454, 1
    %vm459 = vcmp.eq.s32.totalorder %v455, 1
    %v460 = vsel %vm456, %v451, 0.0
    %v461 = vsel %vm457, %v444, 0.0
    %v462 = vsel %vm458, %v445, 0.0
    %v463 = vsel %vm459, %v446, 0.0
    %vm464 = vmand %vm422, %vm368
    %vm465 = vmand %vm423, %vm369
    %vm466 = vmand %vm424, %vm370
    %vm467 = vmand %vm425, %vm371
    %vm468 = vmand %vm464, %vm376
    %vm469 = vmand %vm465, %vm377
    %vm470 = vmand %vm466, %vm378
    %vm471 = vmand %vm467, %vm379
    %472 = vrot.lane.b32.xlu0 %v195, 127
    %v473 = vpop.permute.xlu0 %472
    %474 = vrot.lane.b32.xlu0 %v197, 127
    %v475 = vpop.permute.xlu0 %474
    %476 = vrot.lane.b32.xlu0 %v236, 127
    %v477 = vpop.permute.xlu0 %476
    %478 = vrot.lane.b32.xlu0 %v238, 127
    %v479 = vpop.permute.xlu0 %478
    %vm480 = vcmask 1039360
    %v481 = vsel %vm480, %v473, %v475
    %v482 = vsel %vm480, %v475, %v477
    %v483 = vsel %vm480, %v477, %v479
    %v489 = vsel %vm480, %v479, %v473
    %v490 = vsel %vm468, 1, 0
    %v491 = vsel %vm469, 1, 0
    %v492 = vsel %vm470, 1, 0
    %v493 = vsel %vm471, 1, 0
    %vm494 = vcmp.eq.s32.totalorder %v490, 1
    %vm495 = vcmp.eq.s32.totalorder %v491, 1
    %vm496 = vcmp.eq.s32.totalorder %v492, 1
    %vm497 = vcmp.eq.s32.totalorder %v493, 1
    %v498 = vsel %vm494, %v481, 0.0
    %v499 = vsel %vm495, %v482, 0.0
    %v500 = vsel %vm496, %v483, 0.0
    %v501 = vsel %vm497, %v489, 0.0
    %v502 = vadd.s32 %v45, 1
    %v503 = vadd.s32 %v46, 1
    %v504 = vadd.s32 %v47, 1
    %v505 = vadd.s32 %v48, 1
    %vm506 = vcmp.ge.s32.totalorder %v502, 0
    %vm507 = vcmp.ge.s32.totalorder %v503, 0
    %vm508 = vcmp.ge.s32.totalorder %v504, 0
    %vm509 = vcmp.ge.s32.totalorder %v505, 0
    %vm510 = vcmp.lt.s32.totalorder %v502, 16
    %vm511 = vcmp.lt.s32.totalorder %v503, 16
    %vm512 = vcmp.lt.s32.totalorder %v504, 16
    %vm513 = vcmp.lt.s32.totalorder %v505, 16
    %vm514 = vmand %vm506, %vm510
    %vm515 = vmand %vm507, %vm511
    %vm516 = vmand %vm508, %vm512
    %vm517 = vmand %vm509, %vm513
    %vm518 = vmand %vm514, %vm272
    %vm519 = vmand %vm515, %vm273
    %vm520 = vmand %vm516, %vm274
    %vm521 = vmand %vm517, %vm275
    %vm522 = vmand %vm518, %vm280
    %vm523 = vmand %vm519, %vm281
    %vm524 = vmand %vm520, %vm282
    %vm525 = vmand %vm521, %vm283
    %526 = vrot.lane.b32.xlu0 %v195, 113
    %v527 = vpop.permute.xlu0 %526
    %528 = vrot.lane.b32.xlu0 %v197, 113
    %v529 = vpop.permute.xlu0 %528
    %530 = vrot.lane.b32.xlu0 %v236, 113
    %v531 = vpop.permute.xlu0 %530
    %532 = vrot.lane.b32.xlu0 %v238, 113
    %v533 = vpop.permute.xlu0 %532
    %vm534 = vcmask 924672
    %v535 = vsel %vm534, %v527, %v529
    %v536 = vsel %vm534, %v529, %v531
    %v537 = vsel %vm534, %v531, %v533
    %v543 = vsel %vm534, %v533, %v527
    %v544 = vsel %vm522, 1, 0
    %v545 = vsel %vm523, 1, 0
    %v546 = vsel %vm524, 1, 0
    %v547 = vsel %vm525, 1, 0
    %vm548 = vcmp.eq.s32.totalorder %v544, 1
    %vm549 = vcmp.eq.s32.totalorder %v545, 1
    %vm550 = vcmp.eq.s32.totalorder %v546, 1
    %vm551 = vcmp.eq.s32.totalorder %v547, 1
    %v552 = vsel %vm548, %v535, 0.0
    %v553 = vsel %vm549, %v536, 0.0
    %v554 = vsel %vm550, %v537, 0.0
    %v555 = vsel %vm551, %v543, 0.0
    %vm556 = vmand %vm514, %vm318
    %vm557 = vmand %vm515, %vm319
    %vm558 = vmand %vm516, %vm320
    %vm559 = vmand %vm517, %vm321
    %vm560 = vmand %vm556, %vm326
    %vm561 = vmand %vm557, %vm327
    %vm562 = vmand %vm558, %vm328
    %vm563 = vmand %vm559, %vm329
    %564 = vrot.lane.b32.xlu0 %v195, 112
    %v565 = vpop.permute.xlu0 %564
    %566 = vrot.lane.b32.xlu0 %v197, 112
    %v567 = vpop.permute.xlu0 %566
    %568 = vrot.lane.b32.xlu0 %v236, 112
    %v569 = vpop.permute.xlu0 %568
    %570 = vrot.lane.b32.xlu0 %v238, 112
    %v571 = vpop.permute.xlu0 %570
    %vm572 = vcmask 916480
    %v573 = vsel %vm572, %v565, %v567
    %v574 = vsel %vm572, %v567, %v569
    %v575 = vsel %vm572, %v569, %v571
    %v581 = vsel %vm572, %v571, %v565
    %v582 = vsel %vm560, 1, 0
    %v583 = vsel %vm561, 1, 0
    %v584 = vsel %vm562, 1, 0
    %v585 = vsel %vm563, 1, 0
    %vm586 = vcmp.eq.s32.totalorder %v582, 1
    %vm587 = vcmp.eq.s32.totalorder %v583, 1
    %vm588 = vcmp.eq.s32.totalorder %v584, 1
    %vm589 = vcmp.eq.s32.totalorder %v585, 1
    %v590 = vsel %vm586, %v573, 0.0
    %v591 = vsel %vm587, %v574, 0.0
    %v592 = vsel %vm588, %v575, 0.0
    %v593 = vsel %vm589, %v581, 0.0
    %vm594 = vmand %vm514, %vm368
    %vm595 = vmand %vm515, %vm369
    %vm596 = vmand %vm516, %vm370
    %vm597 = vmand %vm517, %vm371
    %vm598 = vmand %vm594, %vm376
    %vm599 = vmand %vm595, %vm377
    %vm600 = vmand %vm596, %vm378
    %vm601 = vmand %vm597, %vm379
    %602 = vrot.lane.b32.xlu0 %v195, 111
    %v603 = vpop.permute.xlu0 %602
    %604 = vrot.lane.b32.xlu0 %v197, 111
    %v605 = vpop.permute.xlu0 %604
    %606 = vrot.lane.b32.xlu0 %v236, 111
    %v607 = vpop.permute.xlu0 %606
    %608 = vrot.lane.b32.xlu0 %v238, 111
    %v609 = vpop.permute.xlu0 %608
    %vm610 = vcmask 908288
    %v611 = vsel %vm610, %v603, %v605
    %v612 = vsel %vm610, %v605, %v607
    %v613 = vsel %vm610, %v607, %v609
    %v619 = vsel %vm610, %v609, %v603
    %v620 = vsel %vm598, 1, 0
    %v621 = vsel %vm599, 1, 0
    %v622 = vsel %vm600, 1, 0
    %v623 = vsel %vm601, 1, 0
    %vm624 = vcmp.eq.s32.totalorder %v620, 1
    %vm625 = vcmp.eq.s32.totalorder %v621, 1
    %vm626 = vcmp.eq.s32.totalorder %v622, 1
    %vm627 = vcmp.eq.s32.totalorder %v623, 1
    %v628 = vsel %vm624, %v611, 0.0
    %v629 = vsel %vm625, %v612, 0.0
    %v630 = vsel %vm626, %v613, 0.0
    %v631 = vsel %vm627, %v619, 0.0
    %v636 = vrot.slane %v360, 6
    %v637 = vrot.slane %v361, 6
    %v638 = vrot.slane %v362, 6
    %v639 = vrot.slane %v363, 6
    %v648 = vrot.slane %v410, 4
    %v649 = vrot.slane %v411, 4
    %v650 = vrot.slane %v412, 4
    %v651 = vrot.slane %v413, 4
    %v660 = vrot.slane %v460, 2
    %v661 = vrot.slane %v461, 2
    %v662 = vrot.slane %v462, 2
    %v663 = vrot.slane %v463, 2
    %v672 = vrot.slane %v498, 6
    %v673 = vrot.slane %v499, 6
    %v674 = vrot.slane %v500, 6
    %v675 = vrot.slane %v501, 6
    %v684 = vrot.slane %v552, 4
    %v685 = vrot.slane %v553, 4
    %v686 = vrot.slane %v554, 4
    %v687 = vrot.slane %v555, 4
    %v696 = vrot.slane %v590, 2
    %v697 = vrot.slane %v591, 2
    %v698 = vrot.slane %v592, 2
    %v699 = vrot.slane %v593, 2
    %v704 = vsel %vm147, %v314, %v636
    %v705 = vsel %vm147, %v315, %v637
    %v706 = vsel %vm147, %v316, %v638
    %v707 = vsel %vm147, %v317, %v639
    %v708 = vsel %vm55, %v704, %v648
    %v709 = vsel %vm55, %v705, %v649
    %v710 = vsel %vm55, %v706, %v650
    %v711 = vsel %vm55, %v707, %v651
    %vm712 = vcmask 1045504
    %v713 = vsel %vm712, %v708, %v660
    %v714 = vsel %vm712, %v709, %v661
    %v715 = vsel %vm712, %v710, %v662
    %v716 = vsel %vm712, %v711, %v663
    %v717 = vsel %vm147, %v195, %v672
    %v718 = vsel %vm147, %v197, %v673
    %v719 = vsel %vm147, %v236, %v674
    %v720 = vsel %vm147, %v238, %v675
    %v721 = vsel %vm55, %v717, %v684
    %v722 = vsel %vm55, %v718, %v685
    %v723 = vsel %vm55, %v719, %v686
    %v724 = vsel %vm55, %v720, %v687
    %v725 = vsel %vm712, %v721, %v696
    %v726 = vsel %vm712, %v722, %v697
    %v727 = vsel %vm712, %v723, %v698
    %v728 = vsel %vm712, %v724, %v699
    %v729 = vpack.c.bf16 %v725, %v713
    %v730 = vpack.c.bf16 %v726, %v714
    %v731 = vpack.c.bf16 %v727, %v715
    %v732 = vpack.c.bf16 %v728, %v716
    %v733 = vpack.c.bf16 %v628, %v628
    %v734 = vpack.c.bf16 %v629, %v629
    %v735 = vpack.c.bf16 %v630, %v630
    %v736 = vpack.c.bf16 %v631, %v631
    %v737 = vld [vmem:[%s2] sm:$0xf]
    %v738 = vld [vmem:[%s2 + $0x4] sm:$0xf]
    %v739 = vld [vmem:[%s2 + $0x8] sm:$0xf]
    %v740 = vld [vmem:[%s2 + $0xc] sm:$0xf]
    %v745 = vunpack.c.l.b16 %v737
    %v746 = vunpack.c.l.b16 %v738
    %v747 = vunpack.c.l.b16 %v739
    %v748 = vunpack.c.l.b16 %v740
    %v749 = vpack.c.b16 %v746, %v745
    %v750 = vpack.c.b16 %v748, %v747
    %vm751 = vcmask 146432
    %v753 = vsel %vm751, %v749, 0
    %v756 = vsel %vm751, %v750, 0
    %vm758 = vcmask 1040384
    %v760 = vsel %vm758, %v733, 0
    %v763 = vsel %vm758, %v734, 0
    %v766 = vsel %vm758, %v735, 0
    %v769 = vsel %vm758, %v736, 0
    %771 = vmatprep.subr.bf16.mxu0 %v730
    %772 = vmatpush1.bf16.msra.mxu0 %v729
    %773 = vmatprep.subr.bf16.mxu0 %v763
    %774 = vmatpush1.bf16.msra.mxu0 %v760
    %775 = vmatprep.subr.bf16.mxu0 0
    %776 = vmatpush1.bf16.msra.mxu0 0
    %777 = vmatprep.subr.bf16.mxu0 0
    %778 = vmatpush1.bf16.msra.mxu0 0
    %779 = vmatprep.subr.bf16.mxu0 0
    %780 = vmatpush1.bf16.msra.mxu0 0
    %781 = vmatprep.subr.bf16.mxu0 0
    %782 = vmatpush1.bf16.msra.mxu0 0
    %783 = vmatprep.subr.bf16.mxu0 0
    %784 = vmatpush1.bf16.msra.mxu0 0
    %785 = vmatprep.subr.bf16.mxu0 0
    %786 = vmatpush1.bf16.msra.mxu0 0
    %787 = vmatprep.subr.bf16.mxu0 0
    %788 = vmatpush1.bf16.msra.mxu0 0
    %789 = vmatprep.subr.bf16.mxu0 0
    %790 = vmatpush1.bf16.msra.mxu0 0
    %791 = vmatprep.subr.bf16.mxu0 0
    %792 = vmatpush1.bf16.msra.mxu0 0
    %793 = vmatprep.subr.bf16.mxu0 0
    %794 = vmatpush1.bf16.msra.mxu0 0
    %795 = vmatprep.subr.bf16.mxu0 0
    %796 = vmatpush1.bf16.msra.mxu0 0
    %797 = vmatprep.subr.bf16.mxu0 0
    %798 = vmatpush1.bf16.msra.mxu0 0
    %799 = vmatprep.subr.bf16.mxu0 0
    %800 = vmatpush1.bf16.msra.mxu0 0
    %801 = vmatprep.subr.bf16.mxu0 0
    %802 = vmatpush1.bf16.msra.mxu0 0
    %803 = vmatprep.mubr.bf16.mxu0 0
    %804 = vmatmul.mubr.bf16.gmra.mrb[0].mxu0 %v753
    %v805 = vpop.f32.mrb[0].mxu0
    %v806 = vadd.f32 0.0, %v805
    %v807 = vpop.f32.mrb[0].mxu0
    %v808 = vadd.f32 0.0, %v807
    %v809 = vpop.f32.mrb[0].mxu0
    %v810 = vadd.f32 0.0, %v809
    %v811 = vpop.f32.mrb[0].mxu0
    %v812 = vadd.f32 0.0, %v811
    %813 = vmatprep.mubr.bf16.mxu0 0
    %814 = vmatmul.mubr.bf16.gmra.mrb[0].mxu0 %v756
    %v815 = vpop.f32.mrb[0].mxu0
    %v816 = vadd.f32 0.0, %v815
    %v817 = vpop.f32.mrb[0].mxu0
    %v818 = vadd.f32 0.0, %v817
    %v819 = vpop.f32.mrb[0].mxu0
    %v820 = vadd.f32 0.0, %v819
    %v821 = vpop.f32.mrb[0].mxu0
    %v822 = vadd.f32 0.0, %v821
    %823 = vdwg.mxu0
    %824 = vmatprep.subr.bf16.mxu0 %v732
    %825 = vmatpush1.bf16.msra.mxu0 %v731
    %826 = vmatprep.subr.bf16.mxu0 %v769
    %827 = vmatpush1.bf16.msra.mxu0 %v766
    %828 = vmatprep.subr.bf16.mxu0 0
    %829 = vmatpush1.bf16.msra.mxu0 0
    %830 = vmatprep.subr.bf16.mxu0 0
    %831 = vmatpush1.bf16.msra.mxu0 0
    %832 = vmatprep.subr.bf16.mxu0 0
    %833 = vmatpush1.bf16.msra.mxu0 0
    %834 = vmatprep.subr.bf16.mxu0 0
    %835 = vmatpush1.bf16.msra.mxu0 0
    %836 = vmatprep.subr.bf16.mxu0 0
    %837 = vmatpush1.bf16.msra.mxu0 0
    %838 = vmatprep.subr.bf16.mxu0 0
    %839 = vmatpush1.bf16.msra.mxu0 0
    %840 = vmatprep.subr.bf16.mxu0 0
    %841 = vmatpush1.bf16.msra.mxu0 0
    %842 = vmatprep.subr.bf16.mxu0 0
    %843 = vmatpush1.bf16.msra.mxu0 0
    %844 = vmatprep.subr.bf16.mxu0 0
    %845 = vmatpush1.bf16.msra.mxu0 0
    %846 = vmatprep.subr.bf16.mxu0 0
    %847 = vmatpush1.bf16.msra.mxu0 0
    %848 = vmatprep.subr.bf16.mxu0 0
    %849 = vmatpush1.bf16.msra.mxu0 0
    %850 = vmatprep.subr.bf16.mxu0 0
    %851 = vmatpush1.bf16.msra.mxu0 0
    %852 = vmatprep.subr.bf16.mxu0 0
    %853 = vmatpush1.bf16.msra.mxu0 0
    %854 = vmatprep.subr.bf16.mxu0 0
    %855 = vmatpush1.bf16.msra.mxu0 0
    %856 = vmatprep.mubr.bf16.mxu0 0
    %857 = vmatmul.mubr.bf16.gmra.mrb[0].mxu0 %v753
    %v858 = vpop.f32.mrb[0].mxu0
    %v859 = vadd.f32 0.0, %v858
    %v860 = vpop.f32.mrb[0].mxu0
    %v861 = vadd.f32 0.0, %v860
    %v862 = vpop.f32.mrb[0].mxu0
    %v863 = vadd.f32 0.0, %v862
    %v864 = vpop.f32.mrb[0].mxu0
    %v865 = vadd.f32 0.0, %v864
    %866 = vmatprep.mubr.bf16.mxu0 0
    %867 = vmatmul.mubr.bf16.gmra.mrb[0].mxu0 %v756
    %v868 = vpop.f32.mrb[0].mxu0
    %v869 = vadd.f32 0.0, %v868
    %v870 = vpop.f32.mrb[0].mxu0
    %v871 = vadd.f32 0.0, %v870
    %v872 = vpop.f32.mrb[0].mxu0
    %v873 = vadd.f32 0.0, %v872
    %v874 = vpop.f32.mrb[0].mxu0
    %v875 = vadd.f32 0.0, %v874
    %876 = vdwg.mxu0
    %v877 = vadd.f32 %v806, %v808
    %v878 = vadd.f32 %v877, %v859
    %v879 = vadd.f32 %v878, %v861
    %880 = vadd.xlane.f32.xlu0 %v879
    %v881 = vpop.xlane.xlu0 %880
    %v882 = vadd.f32 %v810, %v812
    %v883 = vadd.f32 %v882, %v863
    %v884 = vadd.f32 %v883, %v865
    %885 = vadd.xlane.f32.xlu0 %v884
    %v886 = vpop.xlane.xlu0 %885
    %v887 = vadd.f32 %v816, %v818
    %v888 = vadd.f32 %v887, %v869
    %v889 = vadd.f32 %v888, %v871
    %890 = vadd.xlane.f32.xlu0 %v889
    %v891 = vpop.xlane.xlu0 %890
    %v892 = vadd.f32 %v820, %v822
    %v893 = vadd.f32 %v892, %v873
    %v894 = vadd.f32 %v893, %v875
    %895 = vadd.xlane.f32.xlu0 %v894
    %v896 = vpop.xlane.xlu0 %895
    %v897 = vmul.f32 %v881, %v65
    %v898 = vmul.f32 %v886, %v65
    %v899 = vmul.f32 %v891, %v65
    %v900 = vmul.f32 %v896, %v65
    %v901 = vsub.f32 %v806, %v897
    %v902 = vsub.f32 %v808, %v897
    %v903 = vsub.f32 %v859, %v897
    %v904 = vsub.f32 %v861, %v897
    %v905 = vsub.f32 %v810, %v898
    %v906 = vsub.f32 %v812, %v898
    %v907 = vsub.f32 %v863, %v898
    %v908 = vsub.f32 %v865, %v898
    %v909 = vsub.f32 %v816, %v899
    %v910 = vsub.f32 %v818, %v899
    %v911 = vsub.f32 %v869, %v899
    %v912 = vsub.f32 %v871, %v899
    %v913 = vsub.f32 %v820, %v900
    %v914 = vsub.f32 %v822, %v900
    %v915 = vsub.f32 %v873, %v900
    %v916 = vsub.f32 %v875, %v900
    %v917 = vmul.f32 %v901, %v901
    %v918 = vmul.f32 %v902, %v902
    %v919 = vmul.f32 %v903, %v903
    %v920 = vmul.f32 %v904, %v904
    %v921 = vmul.f32 %v905, %v905
    %v922 = vmul.f32 %v906, %v906
    %v923 = vmul.f32 %v907, %v907
    %v924 = vmul.f32 %v908, %v908
    %v925 = vmul.f32 %v909, %v909
    %v926 = vmul.f32 %v910, %v910
    %v927 = vmul.f32 %v911, %v911
    %v928 = vmul.f32 %v912, %v912
    %v929 = vmul.f32 %v913, %v913
    %v930 = vmul.f32 %v914, %v914
    %v931 = vmul.f32 %v915, %v915
    %v932 = vmul.f32 %v916, %v916
    %v933 = vadd.f32 %v917, %v918
    %v934 = vadd.f32 %v933, %v919
    %v935 = vadd.f32 %v934, %v920
    %936 = vadd.xlane.f32.xlu0 %v935
    %v937 = vpop.xlane.xlu0 %936
    %v938 = vadd.f32 %v921, %v922
    %v939 = vadd.f32 %v938, %v923
    %v940 = vadd.f32 %v939, %v924
    %941 = vadd.xlane.f32.xlu0 %v940
    %v942 = vpop.xlane.xlu0 %941
    %v943 = vadd.f32 %v925, %v926
    %v944 = vadd.f32 %v943, %v927
    %v945 = vadd.f32 %v944, %v928
    %946 = vadd.xlane.f32.xlu0 %v945
    %v947 = vpop.xlane.xlu0 %946
    %v948 = vadd.f32 %v929, %v930
    %v949 = vadd.f32 %v948, %v931
    %v950 = vadd.f32 %v949, %v932
    %951 = vadd.xlane.f32.xlu0 %v950
    %v952 = vpop.xlane.xlu0 %951
    %v953 = vmul.f32 %v937, %v65
    %v954 = vmul.f32 %v942, %v65
    %v955 = vmul.f32 %v947, %v65
    %v956 = vmul.f32 %v952, %v65
    %v957 = vrsqrt.pop %v953
    %v958 = vmul.f32 %v953, %v957
    %vm959 = vcmp.eq.f32.partialorder %v953, inf
    %v960 = vsel %vm959, %v953, %v958
    %vm961 = vcmp.eq.f32.partialorder %v953, 0.0
    %v962 = vand.u32 %v953, 2147483648
    %v963 = vsel %vm961, %v962, %v960
    %v964 = vrsqrt.pop %v954
    %v965 = vmul.f32 %v954, %v964
    %vm966 = vcmp.eq.f32.partialorder %v954, inf
    %v967 = vsel %vm966, %v954, %v965
    %vm968 = vcmp.eq.f32.partialorder %v954, 0.0
    %v969 = vand.u32 %v954, 2147483648
    %v970 = vsel %vm968, %v969, %v967
    %v971 = vrsqrt.pop %v955
    %v972 = vmul.f32 %v955, %v971
    %vm973 = vcmp.eq.f32.partialorder %v955, inf
    %v974 = vsel %vm973, %v955, %v972
    %vm975 = vcmp.eq.f32.partialorder %v955, 0.0
    %v976 = vand.u32 %v955, 2147483648
    %v977 = vsel %vm975, %v976, %v974
    %v978 = vrsqrt.pop %v956
    %v979 = vmul.f32 %v956, %v978
    %vm980 = vcmp.eq.f32.partialorder %v956, inf
    %v981 = vsel %vm980, %v956, %v979
    %vm982 = vcmp.eq.f32.partialorder %v956, 0.0
    %v983 = vand.u32 %v956, 2147483648
    %v984 = vsel %vm982, %v983, %v981
    %v985 = vadd.f32 %v963, 1e-06
    %v986 = vadd.f32 %v970, 1e-06
    %v987 = vadd.f32 %v977, 1e-06
    %v988 = vadd.f32 %v984, 1e-06
    %v989 = vrcp.pop %v985
    %v990 = vmul.f32 1.0, %v989
    %v991 = vrcp.pop %v986
    %v992 = vmul.f32 1.0, %v991
    %v993 = vrcp.pop %v987
    %v994 = vmul.f32 1.0, %v993
    %v995 = vrcp.pop %v988
    %v996 = vmul.f32 1.0, %v995
    %v997 = vmul.f32 %v901, %v990
    %v998 = vmul.f32 %v902, %v990
    %v999 = vmul.f32 %v903, %v990
    %v1000 = vmul.f32 %v904, %v990
    %v1001 = vmul.f32 %v905, %v992
    %v1002 = vmul.f32 %v906, %v992
    %v1003 = vmul.f32 %v907, %v992
    %v1004 = vmul.f32 %v908, %v992
    %v1005 = vmul.f32 %v909, %v994
    %v1006 = vmul.f32 %v910, %v994
    %v1007 = vmul.f32 %v911, %v994
    %v1008 = vmul.f32 %v912, %v994
    %v1009 = vmul.f32 %v913, %v996
    %v1010 = vmul.f32 %v914, %v996
    %v1011 = vmul.f32 %v915, %v996
    %v1012 = vmul.f32 %v916, %v996
    %v1013 = vmax.f32 %v997, 0.0
    %v1014 = vmax.f32 %v998, 0.0
    %v1015 = vmax.f32 %v999, 0.0
    %v1016 = vmax.f32 %v1000, 0.0
    %v1017 = vmax.f32 %v1001, 0.0
    %v1018 = vmax.f32 %v1002, 0.0
    %v1019 = vmax.f32 %v1003, 0.0
    %v1020 = vmax.f32 %v1004, 0.0
    %v1021 = vmax.f32 %v1005, 0.0
    %v1022 = vmax.f32 %v1006, 0.0
    %v1023 = vmax.f32 %v1007, 0.0
    %v1024 = vmax.f32 %v1008, 0.0
    %v1025 = vmax.f32 %v1009, 0.0
    %v1026 = vmax.f32 %v1010, 0.0
    %v1027 = vmax.f32 %v1011, 0.0
    %v1028 = vmax.f32 %v1012, 0.0
    %v1029 = vld [vmem:[%s3] sm:$0xf]
    %v1030 = vld [vmem:[%s3 + $0x4] sm:$0xf]
    %v1031 = vld [vmem:[%s3 + $0x8] sm:$0xf]
    %v1032 = vld [vmem:[%s3 + $0xc] sm:$0xf]
    %v1033 = vpack.c.bf16 %v1017, %v1013
    %v1034 = vpack.c.bf16 %v1018, %v1014
    %v1035 = vpack.c.bf16 %v1019, %v1015
    %v1036 = vpack.c.bf16 %v1020, %v1016
    %v1037 = vpack.c.bf16 %v1025, %v1021
    %v1038 = vpack.c.bf16 %v1026, %v1022
    %v1039 = vpack.c.bf16 %v1027, %v1023
    %v1040 = vpack.c.bf16 %v1028, %v1024
    %v1045 = vunpack.c.l.b16 %v1029
    %v1046 = vunpack.c.l.b16 %v1030
    %v1047 = vunpack.c.l.b16 %v1031
    %v1048 = vunpack.c.l.b16 %v1032
    %v1049 = vpack.c.b16 %v1046, %v1045
    %v1050 = vpack.c.b16 %v1048, %v1047
    %vm1051 = vcmask 261120
    %v1053 = vsel %vm1051, %v1049, 0
    %v1056 = vsel %vm1051, %v1050, 0
    %1058 = vmatprep.subr.bf16.mxu0 %v1034
    %1059 = vmatpush1.bf16.msra.mxu0 %v1033
    %1060 = vmatprep.subr.bf16.mxu0 %v1038
    %1061 = vmatpush1.bf16.msra.mxu0 %v1037
    %1062 = vmatprep.subr.bf16.mxu0 0
    %1063 = vmatpush1.bf16.msra.mxu0 0
    %1064 = vmatprep.subr.bf16.mxu0 0
    %1065 = vmatpush1.bf16.msra.mxu0 0
    %1066 = vmatprep.subr.bf16.mxu0 0
    %1067 = vmatpush1.bf16.msra.mxu0 0
    %1068 = vmatprep.subr.bf16.mxu0 0
    %1069 = vmatpush1.bf16.msra.mxu0 0
    %1070 = vmatprep.subr.bf16.mxu0 0
    %1071 = vmatpush1.bf16.msra.mxu0 0
    %1072 = vmatprep.subr.bf16.mxu0 0
    %1073 = vmatpush1.bf16.msra.mxu0 0
    %1074 = vmatprep.subr.bf16.mxu0 0
    %1075 = vmatpush1.bf16.msra.mxu0 0
    %1076 = vmatprep.subr.bf16.mxu0 0
    %1077 = vmatpush1.bf16.msra.mxu0 0
    %1078 = vmatprep.subr.bf16.mxu0 0
    %1079 = vmatpush1.bf16.msra.mxu0 0
    %1080 = vmatprep.subr.bf16.mxu0 0
    %1081 = vmatpush1.bf16.msra.mxu0 0
    %1082 = vmatprep.subr.bf16.mxu0 0
    %1083 = vmatpush1.bf16.msra.mxu0 0
    %1084 = vmatprep.subr.bf16.mxu0 0
    %1085 = vmatpush1.bf16.msra.mxu0 0
    %1086 = vmatprep.subr.bf16.mxu0 0
    %1087 = vmatpush1.bf16.msra.mxu0 0
    %1088 = vmatprep.subr.bf16.mxu0 0
    %1089 = vmatpush1.bf16.msra.mxu0 0
    %1090 = vmatprep.mubr.bf16.mxu0 0
    %1091 = vmatmul.mubr.bf16.gmra.mrb[0].mxu0 %v1053
    %v1092 = vpop.f32.mrb[0].mxu0
    %v1093 = vadd.f32 0.0, %v1092
    %v1094 = vpop.f32.mrb[0].mxu0
    %v1095 = vadd.f32 0.0, %v1094
    %v1096 = vpop.f32.mrb[0].mxu0
    %v1097 = vadd.f32 0.0, %v1096
    %v1098 = vpop.f32.mrb[0].mxu0
    %v1099 = vadd.f32 0.0, %v1098
    %1100 = vmatprep.mubr.bf16.mxu0 0
    %1101 = vmatmul.mubr.bf16.gmra.mrb[0].mxu0 %v1056
    %v1102 = vpop.f32.mrb[0].mxu0
    %v1103 = vadd.f32 0.0, %v1102
    %v1104 = vpop.f32.mrb[0].mxu0
    %v1105 = vadd.f32 0.0, %v1104
    %v1106 = vpop.f32.mrb[0].mxu0
    %v1107 = vadd.f32 0.0, %v1106
    %v1108 = vpop.f32.mrb[0].mxu0
    %v1109 = vadd.f32 0.0, %v1108
    %1110 = vdwg.mxu0
    %1111 = vmatprep.subr.bf16.mxu0 %v1036
    %1112 = vmatpush1.bf16.msra.mxu0 %v1035
    %1113 = vmatprep.subr.bf16.mxu0 %v1040
    %1114 = vmatpush1.bf16.msra.mxu0 %v1039
    %1115 = vmatprep.subr.bf16.mxu0 0
    %1116 = vmatpush1.bf16.msra.mxu0 0
    %1117 = vmatprep.subr.bf16.mxu0 0
    %1118 = vmatpush1.bf16.msra.mxu0 0
    %1119 = vmatprep.subr.bf16.mxu0 0
    %1120 = vmatpush1.bf16.msra.mxu0 0
    %1121 = vmatprep.subr.bf16.mxu0 0
    %1122 = vmatpush1.bf16.msra.mxu0 0
    %1123 = vmatprep.subr.bf16.mxu0 0
    %1124 = vmatpush1.bf16.msra.mxu0 0
    %1125 = vmatprep.subr.bf16.mxu0 0
    %1126 = vmatpush1.bf16.msra.mxu0 0
    %1127 = vmatprep.subr.bf16.mxu0 0
    %1128 = vmatpush1.bf16.msra.mxu0 0
    %1129 = vmatprep.subr.bf16.mxu0 0
    %1130 = vmatpush1.bf16.msra.mxu0 0
    %1131 = vmatprep.subr.bf16.mxu0 0
    %1132 = vmatpush1.bf16.msra.mxu0 0
    %1133 = vmatprep.subr.bf16.mxu0 0
    %1134 = vmatpush1.bf16.msra.mxu0 0
    %1135 = vmatprep.subr.bf16.mxu0 0
    %1136 = vmatpush1.bf16.msra.mxu0 0
    %1137 = vmatprep.subr.bf16.mxu0 0
    %1138 = vmatpush1.bf16.msra.mxu0 0
    %1139 = vmatprep.subr.bf16.mxu0 0
    %1140 = vmatpush1.bf16.msra.mxu0 0
    %1141 = vmatprep.subr.bf16.mxu0 0
    %1142 = vmatpush1.bf16.msra.mxu0 0
    %1143 = vmatprep.mubr.bf16.mxu0 0
    %1144 = vmatmul.mubr.bf16.gmra.mrb[0].mxu0 %v1053
    %v1145 = vpop.f32.mrb[0].mxu0
    %v1146 = vadd.f32 0.0, %v1145
    %v1147 = vpop.f32.mrb[0].mxu0
    %v1148 = vadd.f32 0.0, %v1147
    %v1149 = vpop.f32.mrb[0].mxu0
    %v1150 = vadd.f32 0.0, %v1149
    %v1151 = vpop.f32.mrb[0].mxu0
    %v1152 = vadd.f32 0.0, %v1151
    %1153 = vmatprep.mubr.bf16.mxu0 0
    %1154 = vmatmul.mubr.bf16.gmra.mrb[0].mxu0 %v1056
    %v1155 = vpop.f32.mrb[0].mxu0
    %v1156 = vadd.f32 0.0, %v1155
    %v1157 = vpop.f32.mrb[0].mxu0
    %v1158 = vadd.f32 0.0, %v1157
    %v1159 = vpop.f32.mrb[0].mxu0
    %v1160 = vadd.f32 0.0, %v1159
    %v1161 = vpop.f32.mrb[0].mxu0
    %v1162 = vadd.f32 0.0, %v1161
    %1163 = vdwg.mxu0
    %v1164 = vadd.f32 %v1093, %v1095
    %v1165 = vadd.f32 %v1164, %v1146
    %v1166 = vadd.f32 %v1165, %v1148
    %1167 = vadd.xlane.f32.xlu0 %v1166
    %v1168 = vpop.xlane.xlu0 %1167
    %v1169 = vadd.f32 %v1097, %v1099
    %v1170 = vadd.f32 %v1169, %v1150
    %v1171 = vadd.f32 %v1170, %v1152
    %1172 = vadd.xlane.f32.xlu0 %v1171
    %v1173 = vpop.xlane.xlu0 %1172
    %v1174 = vadd.f32 %v1103, %v1105
    %v1175 = vadd.f32 %v1174, %v1156
    %v1176 = vadd.f32 %v1175, %v1158
    %1177 = vadd.xlane.f32.xlu0 %v1176
    %v1178 = vpop.xlane.xlu0 %1177
    %v1179 = vadd.f32 %v1107, %v1109
    %v1180 = vadd.f32 %v1179, %v1160
    %v1181 = vadd.f32 %v1180, %v1162
    %1182 = vadd.xlane.f32.xlu0 %v1181
    %v1183 = vpop.xlane.xlu0 %1182
    %v1184 = vmul.f32 %v1168, %v65
    %v1185 = vmul.f32 %v1173, %v65
    %v1186 = vmul.f32 %v1178, %v65
    %v1187 = vmul.f32 %v1183, %v65
    %v1188 = vsub.f32 %v1093, %v1184
    %v1189 = vsub.f32 %v1095, %v1184
    %v1190 = vsub.f32 %v1146, %v1184
    %v1191 = vsub.f32 %v1148, %v1184
    %v1192 = vsub.f32 %v1097, %v1185
    %v1193 = vsub.f32 %v1099, %v1185
    %v1194 = vsub.f32 %v1150, %v1185
    %v1195 = vsub.f32 %v1152, %v1185
    %v1196 = vsub.f32 %v1103, %v1186
    %v1197 = vsub.f32 %v1105, %v1186
    %v1198 = vsub.f32 %v1156, %v1186
    %v1199 = vsub.f32 %v1158, %v1186
    %v1200 = vsub.f32 %v1107, %v1187
    %v1201 = vsub.f32 %v1109, %v1187
    %v1202 = vsub.f32 %v1160, %v1187
    %v1203 = vsub.f32 %v1162, %v1187
    %v1204 = vmul.f32 %v1188, %v1188
    %v1205 = vmul.f32 %v1189, %v1189
    %v1206 = vmul.f32 %v1190, %v1190
    %v1207 = vmul.f32 %v1191, %v1191
    %v1208 = vmul.f32 %v1192, %v1192
    %v1209 = vmul.f32 %v1193, %v1193
    %v1210 = vmul.f32 %v1194, %v1194
    %v1211 = vmul.f32 %v1195, %v1195
    %v1212 = vmul.f32 %v1196, %v1196
    %v1213 = vmul.f32 %v1197, %v1197
    %v1214 = vmul.f32 %v1198, %v1198
    %v1215 = vmul.f32 %v1199, %v1199
    %v1216 = vmul.f32 %v1200, %v1200
    %v1217 = vmul.f32 %v1201, %v1201
    %v1218 = vmul.f32 %v1202, %v1202
    %v1219 = vmul.f32 %v1203, %v1203
    %v1220 = vadd.f32 %v1204, %v1205
    %v1221 = vadd.f32 %v1220, %v1206
    %v1222 = vadd.f32 %v1221, %v1207
    %1223 = vadd.xlane.f32.xlu0 %v1222
    %v1224 = vpop.xlane.xlu0 %1223
    %v1225 = vadd.f32 %v1208, %v1209
    %v1226 = vadd.f32 %v1225, %v1210
    %v1227 = vadd.f32 %v1226, %v1211
    %1228 = vadd.xlane.f32.xlu0 %v1227
    %v1229 = vpop.xlane.xlu0 %1228
    %v1230 = vadd.f32 %v1212, %v1213
    %v1231 = vadd.f32 %v1230, %v1214
    %v1232 = vadd.f32 %v1231, %v1215
    %1233 = vadd.xlane.f32.xlu0 %v1232
    %v1234 = vpop.xlane.xlu0 %1233
    %v1235 = vadd.f32 %v1216, %v1217
    %v1236 = vadd.f32 %v1235, %v1218
    %v1237 = vadd.f32 %v1236, %v1219
    %1238 = vadd.xlane.f32.xlu0 %v1237
    %v1239 = vpop.xlane.xlu0 %1238
    %v1240 = vmul.f32 %v1224, %v65
    %v1241 = vmul.f32 %v1229, %v65
    %v1242 = vmul.f32 %v1234, %v65
    %v1243 = vmul.f32 %v1239, %v65
    %v1244 = vrsqrt.pop %v1240
    %v1245 = vmul.f32 %v1240, %v1244
    %vm1246 = vcmp.eq.f32.partialorder %v1240, inf
    %v1247 = vsel %vm1246, %v1240, %v1245
    %vm1248 = vcmp.eq.f32.partialorder %v1240, 0.0
    %v1249 = vand.u32 %v1240, 2147483648
    %v1250 = vsel %vm1248, %v1249, %v1247
    %v1251 = vrsqrt.pop %v1241
    %v1252 = vmul.f32 %v1241, %v1251
    %vm1253 = vcmp.eq.f32.partialorder %v1241, inf
    %v1254 = vsel %vm1253, %v1241, %v1252
    %vm1255 = vcmp.eq.f32.partialorder %v1241, 0.0
    %v1256 = vand.u32 %v1241, 2147483648
    %v1257 = vsel %vm1255, %v1256, %v1254
    %v1258 = vrsqrt.pop %v1242
    %v1259 = vmul.f32 %v1242, %v1258
    %vm1260 = vcmp.eq.f32.partialorder %v1242, inf
    %v1261 = vsel %vm1260, %v1242, %v1259
    %vm1262 = vcmp.eq.f32.partialorder %v1242, 0.0
    %v1263 = vand.u32 %v1242, 2147483648
    %v1264 = vsel %vm1262, %v1263, %v1261
    %v1265 = vrsqrt.pop %v1243
    %v1266 = vmul.f32 %v1243, %v1265
    %vm1267 = vcmp.eq.f32.partialorder %v1243, inf
    %v1268 = vsel %vm1267, %v1243, %v1266
    %vm1269 = vcmp.eq.f32.partialorder %v1243, 0.0
    %v1270 = vand.u32 %v1243, 2147483648
    %v1271 = vsel %vm1269, %v1270, %v1268
    %v1272 = vadd.f32 %v1250, 1e-06
    %v1273 = vadd.f32 %v1257, 1e-06
    %v1274 = vadd.f32 %v1264, 1e-06
    %v1275 = vadd.f32 %v1271, 1e-06
    %v1276 = vrcp.pop %v1272
    %v1277 = vmul.f32 1.0, %v1276
    %v1278 = vrcp.pop %v1273
    %v1279 = vmul.f32 1.0, %v1278
    %v1280 = vrcp.pop %v1274
    %v1281 = vmul.f32 1.0, %v1280
    %v1282 = vrcp.pop %v1275
    %v1283 = vmul.f32 1.0, %v1282
    %v1284 = vmul.f32 %v1188, %v1277
    %v1285 = vmul.f32 %v1189, %v1277
    %v1286 = vmul.f32 %v1190, %v1277
    %v1287 = vmul.f32 %v1191, %v1277
    %v1288 = vmul.f32 %v1192, %v1279
    %v1289 = vmul.f32 %v1193, %v1279
    %v1290 = vmul.f32 %v1194, %v1279
    %v1291 = vmul.f32 %v1195, %v1279
    %v1292 = vmul.f32 %v1196, %v1281
    %v1293 = vmul.f32 %v1197, %v1281
    %v1294 = vmul.f32 %v1198, %v1281
    %v1295 = vmul.f32 %v1199, %v1281
    %v1296 = vmul.f32 %v1200, %v1283
    %v1297 = vmul.f32 %v1201, %v1283
    %v1298 = vmul.f32 %v1202, %v1283
    %v1299 = vmul.f32 %v1203, %v1283
    %v1300 = vmax.f32 %v1284, 0.0
    %v1301 = vmax.f32 %v1285, 0.0
    %v1302 = vmax.f32 %v1286, 0.0
    %v1303 = vmax.f32 %v1287, 0.0
    %v1304 = vmax.f32 %v1288, 0.0
    %v1305 = vmax.f32 %v1289, 0.0
    %v1306 = vmax.f32 %v1290, 0.0
    %v1307 = vmax.f32 %v1291, 0.0
    %v1308 = vmax.f32 %v1292, 0.0
    %v1309 = vmax.f32 %v1293, 0.0
    %v1310 = vmax.f32 %v1294, 0.0
    %v1311 = vmax.f32 %v1295, 0.0
    %v1312 = vmax.f32 %v1296, 0.0
    %v1313 = vmax.f32 %v1297, 0.0
    %v1314 = vmax.f32 %v1298, 0.0
    %v1315 = vmax.f32 %v1299, 0.0
    %v1316 = vld [vmem:[%s4] sm:$0xf]
    %v1317 = vld [vmem:[%s4 + $0x4] sm:$0xf]
    %v1318 = vld [vmem:[%s4 + $0x8] sm:$0xf]
    %v1319 = vld [vmem:[%s4 + $0xc] sm:$0xf]
    %v1320 = vld [vmem:[%s4 + $0x10] sm:$0x3]
    %v1321 = vpack.c.bf16 %v1304, %v1300
    %v1322 = vpack.c.bf16 %v1305, %v1301
    %v1323 = vpack.c.bf16 %v1306, %v1302
    %v1324 = vpack.c.bf16 %v1307, %v1303
    %v1325 = vpack.c.bf16 %v1312, %v1308
    %v1326 = vpack.c.bf16 %v1313, %v1309
    %v1327 = vpack.c.bf16 %v1314, %v1310
    %v1328 = vpack.c.bf16 %v1315, %v1311
    %v1334 = vunpack.c.l.b16 %v1316
    %v1335 = vunpack.c.l.b16 %v1317
    %v1336 = vunpack.c.l.b16 %v1318
    %v1337 = vunpack.c.l.b16 %v1319
    %v1338 = vunpack.c.l.b16 %v1320
    %v1339 = vpack.c.b16 %v1335, %v1334
    %v1340 = vpack.c.b16 %v1337, %v1336
    %v1341 = vpack.c.b16 %v1338, %v1338
    %v1343 = vsel %vm1051, %v1339, 0
    %v1346 = vsel %vm1051, %v1340, 0
    %v1349 = vsel %vm1051, %v1341, 0
    %1351 = vmatprep.subr.bf16.mxu0 %v1322
    %1352 = vmatpush1.bf16.msra.mxu0 %v1321
    %1353 = vmatprep.subr.bf16.mxu0 %v1326
    %1354 = vmatpush1.bf16.msra.mxu0 %v1325
    %1355 = vmatprep.subr.bf16.mxu0 0
    %1356 = vmatpush1.bf16.msra.mxu0 0
    %1357 = vmatprep.subr.bf16.mxu0 0
    %1358 = vmatpush1.bf16.msra.mxu0 0
    %1359 = vmatprep.subr.bf16.mxu0 0
    %1360 = vmatpush1.bf16.msra.mxu0 0
    %1361 = vmatprep.subr.bf16.mxu0 0
    %1362 = vmatpush1.bf16.msra.mxu0 0
    %1363 = vmatprep.subr.bf16.mxu0 0
    %1364 = vmatpush1.bf16.msra.mxu0 0
    %1365 = vmatprep.subr.bf16.mxu0 0
    %1366 = vmatpush1.bf16.msra.mxu0 0
    %1367 = vmatprep.subr.bf16.mxu0 0
    %1368 = vmatpush1.bf16.msra.mxu0 0
    %1369 = vmatprep.subr.bf16.mxu0 0
    %1370 = vmatpush1.bf16.msra.mxu0 0
    %1371 = vmatprep.subr.bf16.mxu0 0
    %1372 = vmatpush1.bf16.msra.mxu0 0
    %1373 = vmatprep.subr.bf16.mxu0 0
    %1374 = vmatpush1.bf16.msra.mxu0 0
    %1375 = vmatprep.subr.bf16.mxu0 0
    %1376 = vmatpush1.bf16.msra.mxu0 0
    %1377 = vmatprep.subr.bf16.mxu0 0
    %1378 = vmatpush1.bf16.msra.mxu0 0
    %1379 = vmatprep.subr.bf16.mxu0 0
    %1380 = vmatpush1.bf16.msra.mxu0 0
    %1381 = vmatprep.subr.bf16.mxu0 0
    %1382 = vmatpush1.bf16.msra.mxu0 0
    %1383 = vmatprep.mubr.bf16.mxu0 0
    %1384 = vmatmul.mubr.bf16.gmra.mrb[0].mxu0 %v1343
    %v1385 = vpop.f32.mrb[0].mxu0
    %v1386 = vadd.f32 0.0, %v1385
    %v1387 = vpop.f32.mrb[0].mxu0
    %v1388 = vadd.f32 0.0, %v1387
    %v1389 = vpop.f32.mrb[0].mxu0
    %v1390 = vadd.f32 0.0, %v1389
    %v1391 = vpop.f32.mrb[0].mxu0
    %v1392 = vadd.f32 0.0, %v1391
    %1393 = vmatprep.mubr.bf16.mxu0 0
    %1394 = vmatmul.mubr.bf16.gmra.mrb[0].mxu0 %v1346
    %v1395 = vpop.f32.mrb[0].mxu0
    %v1396 = vadd.f32 0.0, %v1395
    %v1397 = vpop.f32.mrb[0].mxu0
    %v1398 = vadd.f32 0.0, %v1397
    %v1399 = vpop.f32.mrb[0].mxu0
    %v1400 = vadd.f32 0.0, %v1399
    %v1401 = vpop.f32.mrb[0].mxu0
    %v1402 = vadd.f32 0.0, %v1401
    %1403 = vmatprep.mubr.bf16.mxu0 0
    %1404 = vmatmul.mubr.bf16.gmra.mrb[0].mxu0 %v1349
    %v1405 = vpop.f32.mrb[0].mxu0
    %v1406 = vadd.f32 0.0, %v1405
    %v1407 = vpop.f32.mrb[0].mxu0
    %v1408 = vadd.f32 0.0, %v1407
    %v1409 = vpop.f32.mrb[0].mxu0
    %v1410 = vpop.f32.mrb[0].mxu0
    %1411 = vdwg.mxu0
    %1412 = vmatprep.subr.bf16.mxu0 %v1324
    %1413 = vmatpush1.bf16.msra.mxu0 %v1323
    %1414 = vmatprep.subr.bf16.mxu0 %v1328
    %1415 = vmatpush1.bf16.msra.mxu0 %v1327
    %1416 = vmatprep.subr.bf16.mxu0 0
    %1417 = vmatpush1.bf16.msra.mxu0 0
    %1418 = vmatprep.subr.bf16.mxu0 0
    %1419 = vmatpush1.bf16.msra.mxu0 0
    %1420 = vmatprep.subr.bf16.mxu0 0
    %1421 = vmatpush1.bf16.msra.mxu0 0
    %1422 = vmatprep.subr.bf16.mxu0 0
    %1423 = vmatpush1.bf16.msra.mxu0 0
    %1424 = vmatprep.subr.bf16.mxu0 0
    %1425 = vmatpush1.bf16.msra.mxu0 0
    %1426 = vmatprep.subr.bf16.mxu0 0
    %1427 = vmatpush1.bf16.msra.mxu0 0
    %1428 = vmatprep.subr.bf16.mxu0 0
    %1429 = vmatpush1.bf16.msra.mxu0 0
    %1430 = vmatprep.subr.bf16.mxu0 0
    %1431 = vmatpush1.bf16.msra.mxu0 0
    %1432 = vmatprep.subr.bf16.mxu0 0
    %1433 = vmatpush1.bf16.msra.mxu0 0
    %1434 = vmatprep.subr.bf16.mxu0 0
    %1435 = vmatpush1.bf16.msra.mxu0 0
    %1436 = vmatprep.subr.bf16.mxu0 0
    %1437 = vmatpush1.bf16.msra.mxu0 0
    %1438 = vmatprep.subr.bf16.mxu0 0
    %1439 = vmatpush1.bf16.msra.mxu0 0
    %1440 = vmatprep.subr.bf16.mxu0 0
    %1441 = vmatpush1.bf16.msra.mxu0 0
    %1442 = vmatprep.subr.bf16.mxu0 0
    %1443 = vmatpush1.bf16.msra.mxu0 0
    %1444 = vmatprep.mubr.bf16.mxu0 0
    %1445 = vmatmul.mubr.bf16.gmra.mrb[0].mxu0 %v1343
    %v1446 = vpop.f32.mrb[0].mxu0
    %v1447 = vadd.f32 0.0, %v1446
    %v1448 = vpop.f32.mrb[0].mxu0
    %v1449 = vadd.f32 0.0, %v1448
    %v1450 = vpop.f32.mrb[0].mxu0
    %v1451 = vadd.f32 0.0, %v1450
    %v1452 = vpop.f32.mrb[0].mxu0
    %v1453 = vadd.f32 0.0, %v1452
    %1454 = vmatprep.mubr.bf16.mxu0 0
    %1455 = vmatmul.mubr.bf16.gmra.mrb[0].mxu0 %v1346
    %v1456 = vpop.f32.mrb[0].mxu0
    %v1457 = vadd.f32 0.0, %v1456
    %v1458 = vpop.f32.mrb[0].mxu0
    %v1459 = vadd.f32 0.0, %v1458
    %v1460 = vpop.f32.mrb[0].mxu0
    %v1461 = vadd.f32 0.0, %v1460
    %v1462 = vpop.f32.mrb[0].mxu0
    %v1463 = vadd.f32 0.0, %v1462
    %1464 = vmatprep.mubr.bf16.mxu0 0
    %1465 = vmatmul.mubr.bf16.gmra.mrb[0].mxu0 %v1349
    %v1466 = vpop.f32.mrb[0].mxu0
    %v1467 = vadd.f32 0.0, %v1466
    %v1468 = vpop.f32.mrb[0].mxu0
    %v1469 = vadd.f32 0.0, %v1468
    %v1470 = vpop.f32.mrb[0].mxu0
    %v1471 = vpop.f32.mrb[0].mxu0
    %1472 = vdwg.mxu0
    %1474 = vrot.lane.b32.xlu0 %v1449, 17
    %v1475 = vpop.permute.xlu0 %1474
    %1480 = vrot.lane.b32.xlu0 %v1386, 17
    %v1481 = vpop.permute.xlu0 %1480
    %1482 = vrot.lane.b32.xlu0 %v1388, 17
    %v1483 = vpop.permute.xlu0 %1482
    %1484 = vrot.lane.b32.xlu0 %v1447, 17
    %v1485 = vpop.permute.xlu0 %1484
    %v1486 = vsel %vm297, %v1481, %v1483
    %v1487 = vsel %vm297, %v1483, %v1485
    %v1488 = vsel %vm297, %v1485, %v1475
    %v1493 = vsel %vm297, %v1475, %v1481
    %v1494 = vsel %vm310, %v1493, 0.0
    %v1495 = vsel %vm311, %v1486, 0.0
    %v1496 = vsel %vm312, %v1487, 0.0
    %v1497 = vsel %vm313, %v1488, 0.0
    %v1498 = vadd.f32 %v1396, %v1494
    %v1499 = vadd.f32 %v1398, %v1495
    %v1500 = vadd.f32 %v1457, %v1496
    %v1501 = vadd.f32 %v1459, %v1497
    %1502 = vrot.lane.b32.xlu0 %v1449, 16
    %v1503 = vpop.permute.xlu0 %1502
    %1505 = vrot.lane.b32.xlu0 %v1386, 16
    %v1506 = vpop.permute.xlu0 %1505
    %1507 = vrot.lane.b32.xlu0 %v1388, 16
    %v1508 = vpop.permute.xlu0 %1507
    %1509 = vrot.lane.b32.xlu0 %v1447, 16
    %v1510 = vpop.permute.xlu0 %1509
    %v1511 = vsel %vm343, %v1506, %v1508
    %v1512 = vsel %vm343, %v1508, %v1510
    %v1513 = vsel %vm343, %v1510, %v1503
    %v1518 = vsel %vm343, %v1503, %v1506
    %v1519 = vsel %vm356, %v1518, 0.0
    %v1520 = vsel %vm357, %v1511, 0.0
    %v1521 = vsel %vm358, %v1512, 0.0
    %v1522 = vsel %vm359, %v1513, 0.0
    %v1527 = vrot.slane %v1519, 4
    %v1528 = vrot.slane %v1520, 4
    %v1529 = vrot.slane %v1521, 4
    %v1530 = vrot.slane %v1522, 4
    %v1535 = vadd.f32 %v1498, %v1527
    %v1536 = vadd.f32 %v1499, %v1528
    %v1537 = vadd.f32 %v1500, %v1529
    %v1538 = vadd.f32 %v1501, %v1530
    %1540 = vrot.lane.b32.xlu0 %v1453, 15
    %v1541 = vpop.permute.xlu0 %1540
    %1546 = vrot.lane.b32.xlu0 %v1390, 15
    %v1547 = vpop.permute.xlu0 %1546
    %1548 = vrot.lane.b32.xlu0 %v1392, 15
    %v1549 = vpop.permute.xlu0 %1548
    %1550 = vrot.lane.b32.xlu0 %v1451, 15
    %v1551 = vpop.permute.xlu0 %1550
    %v1552 = vsel %vm393, %v1547, %v1549
    %v1553 = vsel %vm393, %v1549, %v1551
    %v1554 = vsel %vm393, %v1551, %v1541
    %v1559 = vsel %vm393, %v1541, %v1547
    %v1560 = vsel %vm406, %v1559, 0.0
    %v1561 = vsel %vm407, %v1552, 0.0
    %v1562 = vsel %vm408, %v1553, 0.0
    %v1563 = vsel %vm409, %v1554, 0.0
    %v1564 = vadd.f32 %v1535, %v1560
    %v1565 = vadd.f32 %v1536, %v1561
    %v1566 = vadd.f32 %v1537, %v1562
    %v1567 = vadd.f32 %v1538, %v1563
    %1568 = vrot.lane.b32.xlu0 %v1453, 1
    %v1569 = vpop.permute.xlu0 %1568
    %1571 = vrot.lane.b32.xlu0 %v1390, 1
    %v1572 = vpop.permute.xlu0 %1571
    %1573 = vrot.lane.b32.xlu0 %v1392, 1
    %v1574 = vpop.permute.xlu0 %1573
    %1575 = vrot.lane.b32.xlu0 %v1451, 1
    %v1576 = vpop.permute.xlu0 %1575
    %v1577 = vsel %vm443, %v1572, %v1574
    %v1578 = vsel %vm443, %v1574, %v1576
    %v1579 = vsel %vm443, %v1576, %v1569
    %v1584 = vsel %vm443, %v1569, %v1572
    %v1585 = vsel %vm456, %v1584, 0.0
    %v1586 = vsel %vm457, %v1577, 0.0
    %v1587 = vsel %vm458, %v1578, 0.0
    %v1588 = vsel %vm459, %v1579, 0.0
    %v1593 = vrot.slane %v1585, 4
    %v1594 = vrot.slane %v1586, 4
    %v1595 = vrot.slane %v1587, 4
    %v1596 = vrot.slane %v1588, 4
    %v1601 = vadd.f32 %v1564, %v1593
    %v1602 = vadd.f32 %v1565, %v1594
    %v1603 = vadd.f32 %v1566, %v1595
    %v1604 = vadd.f32 %v1567, %v1596
    %1609 = vrot.lane.b32.xlu0 %v1396, 127
    %v1610 = vpop.permute.xlu0 %1609
    %1611 = vrot.lane.b32.xlu0 %v1398, 127
    %v1612 = vpop.permute.xlu0 %1611
    %1613 = vrot.lane.b32.xlu0 %v1457, 127
    %v1614 = vpop.permute.xlu0 %1613
    %1615 = vrot.lane.b32.xlu0 %v1459, 127
    %v1616 = vpop.permute.xlu0 %1615
    %v1617 = vsel %vm480, %v1610, %v1612
    %v1618 = vsel %vm480, %v1612, %v1614
    %v1619 = vsel %vm480, %v1614, %v1616
    %v1625 = vsel %vm480, %v1616, %v1610
    %v1626 = vsel %vm494, %v1617, 0.0
    %v1627 = vsel %vm495, %v1618, 0.0
    %v1628 = vsel %vm496, %v1619, 0.0
    %v1629 = vsel %vm497, %v1625, 0.0
    %v1634 = vrot.slane %v1626, 4
    %v1635 = vrot.slane %v1627, 4
    %v1636 = vrot.slane %v1628, 4
    %v1637 = vrot.slane %v1629, 4
    %v1642 = vadd.f32 %v1601, %v1634
    %v1643 = vadd.f32 %v1602, %v1635
    %v1644 = vadd.f32 %v1603, %v1636
    %v1645 = vadd.f32 %v1604, %v1637
    %1650 = vrot.lane.b32.xlu0 %v1400, 113
    %v1651 = vpop.permute.xlu0 %1650
    %1652 = vrot.lane.b32.xlu0 %v1402, 113
    %v1653 = vpop.permute.xlu0 %1652
    %1654 = vrot.lane.b32.xlu0 %v1461, 113
    %v1655 = vpop.permute.xlu0 %1654
    %1656 = vrot.lane.b32.xlu0 %v1463, 113
    %v1657 = vpop.permute.xlu0 %1656
    %v1658 = vsel %vm534, %v1651, %v1653
    %v1659 = vsel %vm534, %v1653, %v1655
    %v1660 = vsel %vm534, %v1655, %v1657
    %v1666 = vsel %vm534, %v1657, %v1651
    %v1667 = vsel %vm548, %v1658, 0.0
    %v1668 = vsel %vm549, %v1659, 0.0
    %v1669 = vsel %vm550, %v1660, 0.0
    %v1670 = vsel %vm551, %v1666, 0.0
    %v1671 = vadd.f32 %v1642, %v1667
    %v1672 = vadd.f32 %v1643, %v1668
    %v1673 = vadd.f32 %v1644, %v1669
    %v1674 = vadd.f32 %v1645, %v1670
    %1675 = vrot.lane.b32.xlu0 %v1400, 112
    %v1676 = vpop.permute.xlu0 %1675
    %1677 = vrot.lane.b32.xlu0 %v1402, 112
    %v1678 = vpop.permute.xlu0 %1677
    %1679 = vrot.lane.b32.xlu0 %v1461, 112
    %v1680 = vpop.permute.xlu0 %1679
    %1681 = vrot.lane.b32.xlu0 %v1463, 112
    %v1682 = vpop.permute.xlu0 %1681
    %v1683 = vsel %vm572, %v1676, %v1678
    %v1684 = vsel %vm572, %v1678, %v1680
    %v1685 = vsel %vm572, %v1680, %v1682
    %v1691 = vsel %vm572, %v1682, %v1676
    %v1692 = vsel %vm586, %v1683, 0.0
    %v1693 = vsel %vm587, %v1684, 0.0
    %v1694 = vsel %vm588, %v1685, 0.0
    %v1695 = vsel %vm589, %v1691, 0.0
    %v1700 = vrot.slane %v1692, 4
    %v1701 = vrot.slane %v1693, 4
    %v1702 = vrot.slane %v1694, 4
    %v1703 = vrot.slane %v1695, 4
    %v1708 = vadd.f32 %v1671, %v1700
    %v1709 = vadd.f32 %v1672, %v1701
    %v1710 = vadd.f32 %v1673, %v1702
    %v1711 = vadd.f32 %v1674, %v1703
    %1716 = vrot.lane.b32.xlu0 %v1406, 111
    %v1717 = vpop.permute.xlu0 %1716
    %1718 = vrot.lane.b32.xlu0 %v1408, 111
    %v1719 = vpop.permute.xlu0 %1718
    %1720 = vrot.lane.b32.xlu0 %v1467, 111
    %v1721 = vpop.permute.xlu0 %1720
    %1722 = vrot.lane.b32.xlu0 %v1469, 111
    %v1723 = vpop.permute.xlu0 %1722
    %v1724 = vsel %vm610, %v1717, %v1719
    %v1725 = vsel %vm610, %v1719, %v1721
    %v1726 = vsel %vm610, %v1721, %v1723
    %v1732 = vsel %vm610, %v1723, %v1717
    %v1733 = vsel %vm624, %v1724, 0.0
    %v1734 = vsel %vm625, %v1725, 0.0
    %v1735 = vsel %vm626, %v1726, 0.0
    %v1736 = vsel %vm627, %v1732, 0.0
    %v1737 = vadd.f32 %v1708, %v1733
    %v1738 = vadd.f32 %v1709, %v1734
    %v1739 = vadd.f32 %v1710, %v1735
    %v1740 = vadd.f32 %v1711, %v1736
    %v1741 = vld [vmem:[%s5] sm:$0xf]
    %1743 = vset.pattern.permute.xlu0 0
    %1744 = vperm.xlu0 %1743, %v1741
    %v1745 = vpop.permute.xlu0 %1744
    %v1747 = vadd.f32 %v1737, %v1745
    %v1748 = vadd.f32 %v1738, %v1745
    %v1749 = vadd.f32 %v1739, %v1745
    %v1750 = vadd.f32 %v1740, %v1745
    %v1751 = vadd.f32 %v1747, 2.0
    %v1752 = vadd.f32 %v1748, 2.0
    %v1753 = vadd.f32 %v1749, 2.0
    %v1754 = vadd.f32 %v1750, 2.0
    %v1755 = vand.u32 2147483647, %v1751
    %v1756 = vand.u32 2147483647, %v1752
    %v1757 = vand.u32 2147483647, %v1753
    %v1758 = vand.u32 2147483647, %v1754
    %v1759 = vsub.f32 0.0, %v1755
    %v1760 = vsub.f32 0.0, %v1756
    %v1761 = vsub.f32 0.0, %v1757
    %v1762 = vsub.f32 0.0, %v1758
    %v1763 = vmul.f32 %v1759, 1.442695
    %v1764 = vpow.pop %v1763
    %v1765 = vmul.f32 %v1760, 1.442695
    %v1766 = vpow.pop %v1765
    %v1767 = vmul.f32 %v1761, 1.442695
    %v1768 = vpow.pop %v1767
    %v1769 = vmul.f32 %v1762, 1.442695
    %v1770 = vpow.pop %v1769
    %v1771 = vadd.f32 %v1764, 1.0
    %v1772 = vadd.f32 %v1766, 1.0
    %v1773 = vadd.f32 %v1768, 1.0
    %v1774 = vadd.f32 %v1770, 1.0
    %v1775 = vrcp.pop %v1771
    %v1776 = vmul.f32 1.0, %v1775
    %v1777 = vrcp.pop %v1772
    %v1778 = vmul.f32 1.0, %v1777
    %v1779 = vrcp.pop %v1773
    %v1780 = vmul.f32 1.0, %v1779
    %v1781 = vrcp.pop %v1774
    %v1782 = vmul.f32 1.0, %v1781
    %vm1783 = vcmp.ge.f32.partialorder %v1751, 0.0
    %vm1784 = vcmp.ge.f32.partialorder %v1752, 0.0
    %vm1785 = vcmp.ge.f32.partialorder %v1753, 0.0
    %vm1786 = vcmp.ge.f32.partialorder %v1754, 0.0
    %v1787 = vmul.f32 %v1764, %v1776
    %v1788 = vmul.f32 %v1766, %v1778
    %v1789 = vmul.f32 %v1768, %v1780
    %v1790 = vmul.f32 %v1770, %v1782
    %v1791 = vsel %vm1783, %v1776, %v1787
    %v1792 = vsel %vm1784, %v1778, %v1788
    %v1793 = vsel %vm1785, %v1780, %v1789
    %v1794 = vsel %vm1786, %v1782, %v1790
    %v1795 = vmin.f32 %v1751, 0.0
    %v1796 = vmin.f32 %v1752, 0.0
    %v1797 = vmin.f32 %v1753, 0.0
    %v1798 = vmin.f32 %v1754, 0.0
    %v1799 = vlog2.pop %v1771
    %v1800 = vmul.f32 %v1799, 0.6931472
    %v1801 = vlog2.pop %v1772
    %v1802 = vmul.f32 %v1801, 0.6931472
    %v1803 = vlog2.pop %v1773
    %v1804 = vmul.f32 %v1803, 0.6931472
    %v1805 = vlog2.pop %v1774
    %v1806 = vmul.f32 %v1805, 0.6931472
    %v1807 = vsub.f32 %v1795, %v1800
    %v1808 = vsub.f32 %v1796, %v1802
    %v1809 = vsub.f32 %v1797, %v1804
    %v1810 = vsub.f32 %v1798, %v1806
    %v1815 = vrot.slane %v1747, 6
    %v1816 = vrot.slane %v1748, 6
    %v1817 = vrot.slane %v1749, 6
    %v1818 = vrot.slane %v1750, 6
    %v1823 = vadd.f32 %v195, %v1815
    %v1824 = vadd.f32 %v197, %v1816
    %v1825 = vadd.f32 %v236, %v1817
    %v1826 = vadd.f32 %v238, %v1818
    %v1827 = vmul.f32 %v1823, %v1791
    %v1828 = vmul.f32 %v1824, %v1792
    %v1829 = vmul.f32 %v1825, %v1793
    %v1830 = vmul.f32 %v1826, %v1794
    %v1835 = vcombine.low %v1827, %v1828
    %v1836 = vcombine.low %v1829, %v1830
    %1839 = vst [vmem:[#allocation2] sm:$0xcc] %v1835
    %1840 = vst [vmem:[#allocation2 + $0x8] sm:$0xcc] %v1836
    %v1845 = vrot.slane %v1807, 2
    %v1846 = vrot.slane %v1808, 2
    %v1847 = vrot.slane %v1809, 2
    %v1848 = vrot.slane %v1810, 2
    %v1853 = vsel %vm147, %v1845, 0.0
    %v1854 = vrot.slane %v1853, 4
    %v1855 = vadd.f32 %v1853, %v1854
    %v1856 = vrot.slane %v1855, 2
    %v1857 = vadd.f32 %v1855, %v1856
    %v1858 = vrot.slane %v1857, 1
    %v1859 = vadd.f32 %v1857, %v1858
    %v1860 = vsel %vm147, %v1846, 0.0
    %v1861 = vrot.slane %v1860, 4
    %v1862 = vadd.f32 %v1860, %v1861
    %v1863 = vrot.slane %v1862, 2
    %v1864 = vadd.f32 %v1862, %v1863
    %v1865 = vrot.slane %v1864, 1
    %v1866 = vadd.f32 %v1864, %v1865
    %v1867 = vsel %vm147, %v1847, 0.0
    %v1868 = vrot.slane %v1867, 4
    %v1869 = vadd.f32 %v1867, %v1868
    %v1870 = vrot.slane %v1869, 2
    %v1871 = vadd.f32 %v1869, %v1870
    %v1872 = vrot.slane %v1871, 1
    %v1873 = vadd.f32 %v1871, %v1872
    %v1874 = vsel %vm147, %v1848, 0.0
    %v1875 = vrot.slane %v1874, 4
    %v1876 = vadd.f32 %v1874, %v1875
    %v1877 = vrot.slane %v1876, 2
    %v1878 = vadd.f32 %v1876, %v1877
    %v1879 = vrot.slane %v1878, 1
    %v1880 = vadd.f32 %v1878, %v1879
    %v1881 = vadd.f32 %v1859, %v1866
    %1882 = vadd.xlane.f32.xlu0 %v1881
    %v1883 = vpop.xlane.xlu0 %1882
    %v1884 = vld [vmem:[%s6] sm:$0x1]
    %v1885 = vadd.f32 %v1884, %v131
    %v1886 = vadd.f32 %v1885, %v1883
    %vm1887 = vcmask 0
    %1888 = vst.msk [vmem:[%s8] sm:$0x1] %vm1887, %v1886
    %v1889 = vadd.f32 %v1873, %v1880
    %1890 = vadd.xlane.f32.xlu0 %v1889
    %v1891 = vpop.xlane.xlu0 %1890
    %v1892 = vld [vmem:[%s6 + $0x1] sm:$0x1]
    %v1893 = vadd.f32 %v1892, %v131
    %v1894 = vadd.f32 %v1893, %v1891
    %1895 = vst.msk [vmem:[%s8 + $0x1] sm:$0x1] %vm1887, %v1894
    // Predicated region
    $region30: #{tpu_custom_call.1} parent=1 // pred_check
      _
    $region31: #{tpu_custom_call.1} parent=1 // pred_check_branch
      %1897 = sbr.rel (0) target = $region33
    $region32: #{tpu_custom_call.1} parent=1 // pred_region
      %s1899 = ssub.s32 256, 256
      %1900 = vsyncadd [#allocation3], %s1899
      %s1902 = sshll.u32 [#allocation2], 4
      %s1903 = int_to_ptr.vmem [resolvable:$true] %s1902
      %1905 = dma.vmem_to_hbm [thread:$0]  %s1903, 256, %s7, [#allocation3]
    $region33: #{tpu_custom_call.1} parent=1 // pred_fallthru
      _
    // Predicated region
    $region34: #{tpu_custom_call.1} parent=1 // pred_check
      _
    $region35: #{tpu_custom_call.1} parent=1 // pred_check_branch
      %1907 = sbr.rel (0) target = $region37
    $region36: #{tpu_custom_call.1} parent=1 // pred_region
      _
    $region37: #{tpu_custom_call.1} parent=1 // pred_fallthru
      _
    // Predicated region
    $region38: #{tpu_custom_call.1} parent=1 // pred_check
      _
    $region39: #{tpu_custom_call.1} parent=1 // pred_check_branch
      %1909 = sbr.rel (0) target = $region41
    $region40: #{tpu_custom_call.1} parent=1 // pred_region
      %1910 = dma.done [#allocation3], 256
    $region41: #{tpu_custom_call.1} parent=1 // pred_fallthru
      _
    // Predicated region
    $region42: #{tpu_custom_call.1} parent=1 // pred_check
      _
    $region43: #{tpu_custom_call.1} parent=1 // pred_check_branch
      %1912 = sbr.rel (0) target = $region45
    $region44: #{tpu_custom_call.1} parent=1 // pred_region
      _
    $region45: #{tpu_custom_call.1} parent=1 // pred_fallthru
      _
    %1913 = vsyncpa [#allocation3], 1

</llo_original>
